<compile_context>
chip_gen: v5e
topology: v5e:2x2
jax: 0.10.0
libtpu: 0.0.40
codegen_flags: <defaults>
</compile_context>

<pallas_src>
import functools

import jax
import jax.numpy as jnp
import numpy as np
from jax.experimental import pallas as pl
from jax.experimental.pallas import tpu as pltpu


# ---------------------------------------------------------------- kernel -----

def _layernorm(v, w, b, eps=1e-12):
    # TF-style LayerNorm (eps inside the sqrt), matching the custom LayerNorm.
    u = jnp.mean(v, axis=-1, keepdims=True)
    d = v - u
    var = jnp.mean(d * d, axis=-1, keepdims=True)
    return d * jax.lax.rsqrt(var + eps) * w + b


def _linear_bf16(v, w_bf16, b_f32):
    # v: (M, K) f32 activations, w: (K, N) bf16 (pre-transposed on host),
    # b: (1, N) f32.  bf16 MXU operands, f32 accumulation.
    out = jax.lax.dot_general(
        v.astype(jnp.bfloat16), w_bf16,
        dimension_numbers=(((1,), (0,)), ((), ())),
        preferred_element_type=jnp.float32)
    return out + b_f32


def fused_transf_kernel(x_ref, pos_ref,
                        ln1_w_ref, ln1_b_ref,
                        qkv_w_ref, qkv_b_ref,
                        ow_ref, ob_ref,
                        ln2_w_ref, ln2_b_ref,
                        fcw_ref, fcb_ref, pjw_ref, pjb_ref,
                        o_ref, h_ref, *, n_head):
    layer = pl.program_id(1)
    n_layers = pl.num_programs(1)
    bb, t, c = x_ref.shape
    bt = bb * t
    dh = c // n_head

    # ---- prologue (layer 0 of each batch block): h = x + pos_embeddings ----
    @pl.when(layer == 0)
    def _():
        h_ref[...] = (x_ref[...].astype(jnp.float32)
                      + pos_ref[...][None, :, :]).reshape(bt, c)

    h = h_ref[...]                                   # (bb*T, C) f32 carry in VMEM

    # ---- attention branch: h + out_proj(MHA(LN1(h))) ----
    y = _layernorm(h, ln1_w_ref[...], ln1_b_ref[...])
    qkv = _linear_bf16(y, qkv_w_ref[...], qkv_b_ref[...])        # (bt, 3C) f32
    q = qkv[:, :c].reshape(bb, t, c)                 # 1/sqrt(dh) folded into q slab
    k = qkv[:, c:2 * c].reshape(bb, t, c)
    v = qkv[:, 2 * c:].reshape(bb, t, c)

    ctx_heads = []
    for hh in range(n_head):        # tiny static loop; single-batch-dim einsums only
        sl = slice(hh * dh, (hh + 1) * dh)
        qh, kh, vh = q[..., sl], k[..., sl], v[..., sl]
        s = jnp.einsum('bqd,bkd->bqk', qh, kh,
                       preferred_element_type=jnp.float32)
        s = s - jnp.max(s, axis=-1, keepdims=True)
        p = jnp.exp(s)
        p = p * pl.reciprocal(jnp.sum(p, axis=-1, keepdims=True), approx=True)
        ctx = jnp.einsum('bqk,bkd->bqd', p, vh,
                         preferred_element_type=jnp.float32)
        ctx_heads.append(ctx.reshape(bt, dh))
    ctx_all = ctx_heads[0] if n_head == 1 else jnp.concatenate(ctx_heads, axis=-1)
    h = h + _linear_bf16(ctx_all, ow_ref[...], ob_ref[...])      # single (C,C) matmul

    # ---- MLP branch: h + c_proj(QuickGELU(c_fc(LN2(h)))) ----
    y2 = _layernorm(h, ln2_w_ref[...], ln2_b_ref[...])
    hid = _linear_bf16(y2, fcw_ref[...], fcb_ref[...])
    hid = hid * jax.nn.sigmoid(1.702 * hid)          # QuickGELU, f32
    h = h + _linear_bf16(hid, pjw_ref[...], pjb_ref[...])

    h_ref[...] = h                                   # carry to next layer

    # ---- epilogue (last layer only): (h + x_original).mean(dim=1) ----
    @pl.when(layer == n_layers - 1)
    def _():
        res = h.reshape(bb, t, c) + x_ref[...].astype(jnp.float32)
        o_ref[...] = jnp.mean(res, axis=1).astype(o_ref.dtype)


# ---------------------------------------------------------------- wrapper ----

def visual_prompt_transf(x, kparams, n_head, *, batch_blocks=1):
    """batch_blocks: number of blocks on the leading 'parallel' grid axis.
    Set to the TensorCore count per chip (2 on v7x, 1 on v5e/v6e for large
    models; harmless either way at small sizes)."""
    b, t, c = x.shape
    assert b % batch_blocks == 0
    bb = b // batch_blocks
    n_layers = kparams['ln1_w'].shape[0]
    pos = kparams['pos']                             # (t, c) f32

    lmap = lambda bi, l: (l, 0, 0)                   # per-layer weight block
    row = lambda d: pl.BlockSpec((None, 1, d), lmap)
    mat = lambda d1, d2: pl.BlockSpec((None, d1, d2), lmap)

    in_specs = [
        pl.BlockSpec((bb, t, c), lambda bi, l: (bi, 0, 0)),       # x (per batch blk)
        pl.BlockSpec((t, c), lambda bi, l: (0, 0)),               # pos emb
        row(c), row(c),                                           # ln1 w/b
        mat(c, 3 * c), row(3 * c),                                # fused qkv w/b (bf16/f32)
        mat(c, c), row(c),                                        # out_proj w/b
        row(c), row(c),                                           # ln2 w/b
        mat(c, 4 * c), row(4 * c),                                # fc w/b
        mat(4 * c, c), row(c),                                    # proj w/b
    ]

    kernel = functools.partial(fused_transf_kernel, n_head=n_head)
    out = pl.pallas_call(
        kernel,
        # 3-D output so the last-two block dims equal full array dims even
        # when bb < 8 (avoids sublane-alignment constraints); reshaped below.
        out_shape=jax.ShapeDtypeStruct((batch_blocks, bb, c), x.dtype),
        grid_spec=pltpu.PrefetchScalarGridSpec(
            num_scalar_prefetch=0,
            grid=(batch_blocks, n_layers),
            in_specs=in_specs,
            out_specs=pl.BlockSpec((None, bb, c), lambda bi, l: (bi, 0, 0)),
            scratch_shapes=[pltpu.VMEM((bb * t, c), jnp.float32)],
        ),
        compiler_params=pltpu.CompilerParams(
            dimension_semantics=("parallel", "arbitrary"),
            vmem_limit_bytes=48 * 1024 * 1024),
    )(x, pos,
      kparams['ln1_w'], kparams['ln1_b'],
      kparams['qkv_w'], kparams['qkv_b'],
      kparams['out_w'], kparams['out_b'],
      kparams['ln2_w'], kparams['ln2_b'],
      kparams['fc_w'], kparams['fc_b'],
      kparams['pj_w'], kparams['pj_b'])
    return out.reshape(b, c)


# ----------------------------------------------------------- param setup -----

def init_params(key, embed_dim, context_length, n_layers=6, std=0.02):
    """Torch-convention synthetic init mirroring the module's __init__ shapes."""
    c = embed_dim
    keys = jax.random.split(key, 1 + n_layers * 4)
    pos_emb = std * jax.random.normal(keys[0], (context_length, c), jnp.float32)
    layers = []
    ki = 1
    for _ in range(n_layers):
        k_in, k_out, k_fc, k_pj = keys[ki:ki + 4]
        ki += 4
        layers.append(dict(
            ln1_w=jnp.ones((1, c), jnp.float32),
            ln1_b=jnp.zeros((1, c), jnp.float32),
            in_w=std * jax.random.normal(k_in, (3 * c, c), jnp.float32),
            in_b=jnp.zeros((1, 3 * c), jnp.float32),
            out_w=std * jax.random.normal(k_out, (c, c), jnp.float32),
            out_b=jnp.zeros((1, c), jnp.float32),
            ln2_w=jnp.ones((1, c), jnp.float32),
            ln2_b=jnp.zeros((1, c), jnp.float32),
            fc_w=std * jax.random.normal(k_fc, (4 * c, c), jnp.float32),
            fc_b=jnp.zeros((1, 4 * c), jnp.float32),
            pj_w=std * jax.random.normal(k_pj, (c, 4 * c), jnp.float32),
            pj_b=jnp.zeros((1, c), jnp.float32),
        ))
    return {'pos_emb': pos_emb, 'layers': layers}


def prepare_kernel_params(params, t, n_head, weight_dtype=jnp.bfloat16):
    """Host-side prep: transpose to (Cin,Cout), fuse q/k/v into one (C,3C) slab,
    fold the 1/sqrt(dh) scale into the q slice, cast weight slabs to bf16,
    stack over layers.  Biases / LN params stay f32."""
    layers = params['layers']
    c = layers[0]['out_w'].shape[0]
    dh = c // n_head
    scale = 1.0 / float(np.sqrt(dh))

    def stack(fn, dtype=jnp.float32):
        return jnp.stack([fn(lp) for lp in layers], axis=0).astype(dtype)

    return dict(
        pos=params['pos_emb'][:t].astype(jnp.float32),
        ln1_w=stack(lambda lp: lp['ln1_w']),
        ln1_b=stack(lambda lp: lp['ln1_b']),
        qkv_w=stack(lambda lp: jnp.concatenate(
            [lp['in_w'][:c].T * scale,
             lp['in_w'][c:2 * c].T,
             lp['in_w'][2 * c:].T], axis=1), weight_dtype),
        qkv_b=stack(lambda lp: jnp.concatenate(
            [lp['in_b'][:, :c] * scale,
             lp['in_b'][:, c:2 * c],
             lp['in_b'][:, 2 * c:]], axis=1)),
        out_w=stack(lambda lp: lp['out_w'].T, weight_dtype),
        out_b=stack(lambda lp: lp['out_b']),
        ln2_w=stack(lambda lp: lp['ln2_w']),
        ln2_b=stack(lambda lp: lp['ln2_b']),
        fc_w=stack(lambda lp: lp['fc_w'].T, weight_dtype),
        fc_b=stack(lambda lp: lp['fc_b']),
        pj_w=stack(lambda lp: lp['pj_w'].T, weight_dtype),
        pj_b=stack(lambda lp: lp['pj_b']),
    )


# ------------------------------------------------------ pure-JAX reference ---

def reference_forward(x, params, n_head):
    b, t, c = x.shape
    dh = c // n_head

    def ln(v, w, bias):
        u = v.mean(-1, keepdims=True)
        s = ((v - u) ** 2).mean(-1, keepdims=True)
        return w * ((v - u) / jnp.sqrt(s + 1e-12)) + bias

    h = x + params['pos_emb'][:t][None]
    for lp in params['layers']:
        y = ln(h, lp['ln1_w'], lp['ln1_b'])
        qkv = jnp.einsum('btc,dc->btd', y, lp['in_w']) + lp['in_b']
        q = qkv[..., :c] / jnp.sqrt(dh)
        k = qkv[..., c:2 * c]
        v = qkv[..., 2 * c:]
        qh = q.reshape(b, t, n_head, dh)
        kh = k.reshape(b, t, n_head, dh)
        vh = v.reshape(b, t, n_head, dh)
        s = jnp.einsum('bqhd,bkhd->bhqk', qh, kh)
        p = jax.nn.softmax(s, axis=-1)
        ctx = jnp.einsum('bhqk,bkhd->bqhd', p, vh).reshape(b, t, c)
        h = h + jnp.einsum('btc,dc->btd', ctx, lp['out_w']) + lp['out_b']
        y2 = ln(h, lp['ln2_w'], lp['ln2_b'])
        hid = jnp.einsum('btc,dc->btd', y2, lp['fc_w']) + lp['fc_b']
        hid = hid * jax.nn.sigmoid(1.702 * hid)
        h = h + jnp.einsum('bth,dh->btd', hid, lp['pj_w']) + lp['pj_b']
    return (h + x).mean(axis=1)


# ---------------------------------------------------------------------- main -

if __name__ == "__main__":
    # Shapes implied by the module: x is (b, t, c); clip_state_dict supplies
    # embed_dim (= C), context_length, transformer_width (-> heads = width // 64).
    B, T, C = 2, 8, 32
    CONTEXT_LEN = 16
    TRANSFORMER_WIDTH = 128
    N_HEAD = TRANSFORMER_WIDTH // 64      # = 2, head_dim = 16
    N_LAYERS = 6                          # TemporalTransformer(layers=6)

    key = jax.random.PRNGKey(0)
    kx, kp = jax.random.split(key)
    x = jax.random.normal(kx, (B, T, C), jnp.float32)
    params = init_params(kp, C, CONTEXT_LEN, N_LAYERS)
    kparams = prepare_kernel_params(params, T, N_HEAD)

    # batch_blocks=2 exercises the parallel batch-block axis (and the per-block
    # carry re-initialisation); set to 1 on single-TC chips for large models.
    out = visual_prompt_transf(x, kparams, N_HEAD, batch_blocks=2)
    out = jax.block_until_ready(out)

    ref = reference_forward(x, params, N_HEAD)
    assert out.shape == (B, C)
    # Tolerance loosened vs. the pure-f32 version because matmul weights are
    # streamed as bf16 (f32 accumulation / residual carry).
    np.testing.assert_allclose(np.asarray(out), np.asarray(ref), rtol=5e-3, atol=5e-3)

    # TODO(synk): only the sim_header == 'Transf' branch is implemented; the
    # LSTM / Transf_cls / Conv_1D / meanP branches are not covered here.
    print("KERNEL_OK")
</pallas_src>

<mosaic_0001>
module attributes {stable_mosaic.version = 11 : i64} {
  func.func @fused_transf_kernel(%arg0: i32, %arg1: i32, %arg2: memref<1x8x32xf32, #tpu.memory_space<vmem>>, %arg3: memref<8x32xf32, #tpu.memory_space<vmem>>, %arg4: memref<1x1x32xf32, #tpu.memory_space<vmem>>, %arg5: memref<1x1x32xf32, #tpu.memory_space<vmem>>, %arg6: memref<1x32x96xbf16, #tpu.memory_space<vmem>>, %arg7: memref<1x1x96xf32, #tpu.memory_space<vmem>>, %arg8: memref<1x32x32xbf16, #tpu.memory_space<vmem>>, %arg9: memref<1x1x32xf32, #tpu.memory_space<vmem>>, %arg10: memref<1x1x32xf32, #tpu.memory_space<vmem>>, %arg11: memref<1x1x32xf32, #tpu.memory_space<vmem>>, %arg12: memref<1x32x128xbf16, #tpu.memory_space<vmem>>, %arg13: memref<1x1x128xf32, #tpu.memory_space<vmem>>, %arg14: memref<1x128x32xbf16, #tpu.memory_space<vmem>>, %arg15: memref<1x1x32xf32, #tpu.memory_space<vmem>>, %arg16: memref<1x1x32xf32, #tpu.memory_space<vmem>>, %arg17: memref<8x32xf32, #tpu.memory_space<vmem>>) attributes {dimension_semantics = [#tpu.dimension_semantics<parallel>, #tpu.dimension_semantics<arbitrary>], iteration_bounds = array<i64: 2, 6>, scalar_prefetch = 0 : i64, scratch_operands = 1 : i64, tpu.core_type = #tpu.core_type<tc>, window_params = [{transform_indices = @transform_0, window_bounds = array<i64: 1, 8, 32>}, {pipeline_mode = #tpu.pipeline_mode<synchronous>, transform_indices = @transform_1, window_bounds = array<i64: 8, 32>}, {transform_indices = @transform_2, window_bounds = array<i64: 1, 1, 32>}, {transform_indices = @transform_3, window_bounds = array<i64: 1, 1, 32>}, {transform_indices = @transform_4, window_bounds = array<i64: 1, 32, 96>}, {transform_indices = @transform_5, window_bounds = array<i64: 1, 1, 96>}, {transform_indices = @transform_6, window_bounds = array<i64: 1, 32, 32>}, {transform_indices = @transform_7, window_bounds = array<i64: 1, 1, 32>}, {transform_indices = @transform_8, window_bounds = array<i64: 1, 1, 32>}, {transform_indices = @transform_9, window_bounds = array<i64: 1, 1, 32>}, {transform_indices = @transform_10, window_bounds = array<i64: 1, 32, 128>}, {transform_indices = @transform_11, window_bounds = array<i64: 1, 1, 128>}, {transform_indices = @transform_12, window_bounds = array<i64: 1, 128, 32>}, {transform_indices = @transform_13, window_bounds = array<i64: 1, 1, 32>}, {transform_indices = @transform_14, window_bounds = array<i64: 1, 1, 32>}]} {
    %c0_i32 = arith.constant 0 : i32
    %0 = arith.cmpi eq, %arg1, %c0_i32 : i32
    %1 = arith.extui %0 : i1 to i32
    %c0_i32_0 = arith.constant 0 : i32
    %2 = arith.cmpi ne, %1, %c0_i32_0 : i32
    scf.if %2 {
      %c0_64 = arith.constant 0 : index
      %c0_65 = arith.constant 0 : index
      %c0_66 = arith.constant 0 : index
      %137 = vector.load %arg2[%c0_64, %c0_65, %c0_66] : memref<1x8x32xf32, #tpu.memory_space<vmem>>, vector<1x8x32xf32>
      %c0_67 = arith.constant 0 : index
      %c0_68 = arith.constant 0 : index
      %138 = vector.load %arg3[%c0_67, %c0_68] : memref<8x32xf32, #tpu.memory_space<vmem>>, vector<8x32xf32>
      %139 = vector.shape_cast %138 : vector<8x32xf32> to vector<1x8x32xf32>
      %140 = arith.addf %137, %139 : vector<1x8x32xf32>
      %141 = vector.shape_cast %140 : vector<1x8x32xf32> to vector<8x32xf32>
      %c0_69 = arith.constant 0 : index
      %c0_70 = arith.constant 0 : index
      %142 = vector.load %arg17[%c0_69, %c0_70] : memref<8x32xf32, #tpu.memory_space<vmem>>, vector<8x32xf32>
      tpu.vector_store %arg17[%c0_69, %c0_70], %141 {strides = array<i32>} : memref<8x32xf32, #tpu.memory_space<vmem>>, vector<8x32xf32>,
    } else {
    }
    %c0 = arith.constant 0 : index
    %c0_1 = arith.constant 0 : index
    %3 = vector.load %arg17[%c0, %c0_1] : memref<8x32xf32, #tpu.memory_space<vmem>>, vector<8x32xf32>
    %c0_2 = arith.constant 0 : index
    %c0_3 = arith.constant 0 : index
    %c0_4 = arith.constant 0 : index
    %4 = vector.load %arg4[%c0_2, %c0_3, %c0_4] : memref<1x1x32xf32, #tpu.memory_space<vmem>>, vector<1x1x32xf32>
    %5 = vector.shape_cast %4 : vector<1x1x32xf32> to vector<1x32xf32>
    %c0_5 = arith.constant 0 : index
    %c0_6 = arith.constant 0 : index
    %c0_7 = arith.constant 0 : index
    %6 = vector.load %arg5[%c0_5, %c0_6, %c0_7] : memref<1x1x32xf32, #tpu.memory_space<vmem>>, vector<1x1x32xf32>
    %7 = vector.shape_cast %6 : vector<1x1x32xf32> to vector<1x32xf32>
    %cst = arith.constant dense<0.000000e+00> : vector<8xf32>
    %8 = vector.multi_reduction <add>, %3, %cst [1] : vector<8x32xf32> to vector<8xf32>
    %9 = vector.shape_cast %8 : vector<8xf32> to vector<8x1xf32>
    %cst_8 = arith.constant 3.200000e+01 : f32
    %10 = vector.broadcast %cst_8 : f32 to vector<8x1xf32>
    %11 = arith.divf %9, %10 : vector<8x1xf32>
    %12 = vector.broadcast %11 : vector<8x1xf32> to vector<8x32xf32>
    %13 = arith.subf %3, %12 : vector<8x32xf32>
    %14 = arith.mulf %13, %13 : vector<8x32xf32>
    %cst_9 = arith.constant dense<0.000000e+00> : vector<8xf32>
    %15 = vector.multi_reduction <add>, %14, %cst_9 [1] : vector<8x32xf32> to vector<8xf32>
    %16 = vector.shape_cast %15 : vector<8xf32> to vector<8x1xf32>
    %cst_10 = arith.constant 3.200000e+01 : f32
    %17 = vector.broadcast %cst_10 : f32 to vector<8x1xf32>
    %18 = arith.divf %16, %17 : vector<8x1xf32>
    %cst_11 = arith.constant 9.99999996E-13 : f32
    %19 = vector.broadcast %cst_11 : f32 to vector<8x1xf32>
    %20 = arith.addf %18, %19 : vector<8x1xf32>
    %21 = math.rsqrt %20 : vector<8x1xf32>
    %22 = vector.broadcast %21 : vector<8x1xf32> to vector<8x32xf32>
    %23 = arith.mulf %13, %22 : vector<8x32xf32>
    %24 = vector.broadcast %5 : vector<1x32xf32> to vector<8x32xf32>
    %25 = arith.mulf %23, %24 : vector<8x32xf32>
    %26 = vector.broadcast %7 : vector<1x32xf32> to vector<8x32xf32>
    %27 = arith.addf %25, %26 : vector<8x32xf32>
    %c0_12 = arith.constant 0 : index
    %c0_13 = arith.constant 0 : index
    %c0_14 = arith.constant 0 : index
    %28 = vector.load %arg6[%c0_12, %c0_13, %c0_14] : memref<1x32x96xbf16, #tpu.memory_space<vmem>>, vector<1x32x96xbf16>
    %29 = vector.shape_cast %28 : vector<1x32x96xbf16> to vector<32x96xbf16>
    %c0_15 = arith.constant 0 : index
    %c0_16 = arith.constant 0 : index
    %c0_17 = arith.constant 0 : index
    %30 = vector.load %arg7[%c0_15, %c0_16, %c0_17] : memref<1x1x96xf32, #tpu.memory_space<vmem>>, vector<1x1x96xf32>
    %31 = vector.shape_cast %30 : vector<1x1x96xf32> to vector<1x96xf32>
    %32 = arith.truncf %27 : vector<8x32xf32> to vector<8x32xbf16>
    %cst_18 = arith.constant dense<0.000000e+00> : vector<8x96xf32>
    %33 = tpu.matmul %32, %29, %cst_18 {dimension_numbers = #tpu.dot_dimension_numbers<[1], [0], [0], [1], [0, 0, 1, 1], [], []>} : vector<8x32xbf16>, vector<32x96xbf16>, vector<8x96xf32> -> vector<8x96xf32>
    %34 = vector.broadcast %31 : vector<1x96xf32> to vector<8x96xf32>
    %35 = arith.addf %33, %34 : vector<8x96xf32>
    %36 = vector.extract_strided_slice %35 {offsets = [0, 0], sizes = [8, 32], strides = [1, 1]} : vector<8x96xf32> to vector<8x32xf32>
    %37 = vector.shape_cast %36 : vector<8x32xf32> to vector<1x8x32xf32>
    %38 = vector.extract_strided_slice %35 {offsets = [0, 32], sizes = [8, 32], strides = [1, 1]} : vector<8x96xf32> to vector<8x32xf32>
    %39 = vector.shape_cast %38 : vector<8x32xf32> to vector<1x8x32xf32>
    %40 = vector.extract_strided_slice %35 {offsets = [0, 64], sizes = [8, 32], strides = [1, 1]} : vector<8x96xf32> to vector<8x32xf32>
    %41 = vector.shape_cast %40 : vector<8x32xf32> to vector<1x8x32xf32>
    %42 = vector.extract_strided_slice %37 {offsets = [0, 0, 0], sizes = [1, 8, 16], strides = [1, 1, 1]} : vector<1x8x32xf32> to vector<1x8x16xf32>
    %43 = vector.extract_strided_slice %39 {offsets = [0, 0, 0], sizes = [1, 8, 16], strides = [1, 1, 1]} : vector<1x8x32xf32> to vector<1x8x16xf32>
    %44 = vector.extract_strided_slice %41 {offsets = [0, 0, 0], sizes = [1, 8, 16], strides = [1, 1, 1]} : vector<1x8x32xf32> to vector<1x8x16xf32>
    "tpu.trace_start"() <{level = 10 : i32, message = "bqd,bkd->bqk"}> : () -> ()
    %cst_19 = arith.constant dense<0.000000e+00> : vector<1x8x8xf32>
    %45 = tpu.matmul %42, %43, %cst_19 {dimension_numbers = #tpu.dot_dimension_numbers<[2], [2], [1], [1], [0, 0, 0, 1, 1, 1], [0], [0]>} : vector<1x8x16xf32>, vector<1x8x16xf32>, vector<1x8x8xf32> -> vector<1x8x8xf32>
    "tpu.trace_stop"() : () -> ()
    %cst_20 = arith.constant dense<0xFF800000> : vector<1x8xf32>
    %46 = vector.multi_reduction <maximumf>, %45, %cst_20 [2] : vector<1x8x8xf32> to vector<1x8xf32>
    %47 = vector.shape_cast %46 : vector<1x8xf32> to vector<1x8x1xf32>
    %48 = vector.broadcast %47 : vector<1x8x1xf32> to vector<1x8x8xf32>
    %49 = arith.subf %45, %48 : vector<1x8x8xf32>
    %50 = math.exp %49 : vector<1x8x8xf32>
    %cst_21 = arith.constant dense<0.000000e+00> : vector<1x8xf32>
    %51 = vector.multi_reduction <add>, %50, %cst_21 [2] : vector<1x8x8xf32> to vector<1x8xf32>
    %52 = vector.shape_cast %51 : vector<1x8xf32> to vector<1x8x1xf32>
    %53 = tpu.reciprocal %52 {approx = true} : vector<1x8x1xf32> -> vector<1x8x1xf32>
    %54 = vector.broadcast %53 : vector<1x8x1xf32> to vector<1x8x8xf32>
    %55 = arith.mulf %50, %54 : vector<1x8x8xf32>
    "tpu.trace_start"() <{level = 10 : i32, message = "bqk,bkd->bqd"}> : () -> ()
    %cst_22 = arith.constant dense<0.000000e+00> : vector<1x8x16xf32>
    %56 = tpu.matmul %55, %44, %cst_22 {dimension_numbers = #tpu.dot_dimension_numbers<[2], [1], [1], [2], [0, 0, 0, 1, 1, 2], [0], [0]>} : vector<1x8x8xf32>, vector<1x8x16xf32>, vector<1x8x16xf32> -> vector<1x8x16xf32>
    "tpu.trace_stop"() : () -> ()
    %57 = vector.shape_cast %56 : vector<1x8x16xf32> to vector<8x16xf32>
    %58 = vector.extract_strided_slice %37 {offsets = [0, 0, 16], sizes = [1, 8, 16], strides = [1, 1, 1]} : vector<1x8x32xf32> to vector<1x8x16xf32>
    %59 = vector.extract_strided_slice %39 {offsets = [0, 0, 16], sizes = [1, 8, 16], strides = [1, 1, 1]} : vector<1x8x32xf32> to vector<1x8x16xf32>
    %60 = vector.extract_strided_slice %41 {offsets = [0, 0, 16], sizes = [1, 8, 16], strides = [1, 1, 1]} : vector<1x8x32xf32> to vector<1x8x16xf32>
    "tpu.trace_start"() <{level = 10 : i32, message = "bqd,bkd->bqk"}> : () -> ()
    %cst_23 = arith.constant dense<0.000000e+00> : vector<1x8x8xf32>
    %61 = tpu.matmul %58, %59, %cst_23 {dimension_numbers = #tpu.dot_dimension_numbers<[2], [2], [1], [1], [0, 0, 0, 1, 1, 1], [0], [0]>} : vector<1x8x16xf32>, vector<1x8x16xf32>, vector<1x8x8xf32> -> vector<1x8x8xf32>
    "tpu.trace_stop"() : () -> ()
    %cst_24 = arith.constant dense<0xFF800000> : vector<1x8xf32>
    %62 = vector.multi_reduction <maximumf>, %61, %cst_24 [2] : vector<1x8x8xf32> to vector<1x8xf32>
    %63 = vector.shape_cast %62 : vector<1x8xf32> to vector<1x8x1xf32>
    %64 = vector.broadcast %63 : vector<1x8x1xf32> to vector<1x8x8xf32>
    %65 = arith.subf %61, %64 : vector<1x8x8xf32>
    %66 = math.exp %65 : vector<1x8x8xf32>
    %cst_25 = arith.constant dense<0.000000e+00> : vector<1x8xf32>
    %67 = vector.multi_reduction <add>, %66, %cst_25 [2] : vector<1x8x8xf32> to vector<1x8xf32>
    %68 = vector.shape_cast %67 : vector<1x8xf32> to vector<1x8x1xf32>
    %69 = tpu.reciprocal %68 {approx = true} : vector<1x8x1xf32> -> vector<1x8x1xf32>
    %70 = vector.broadcast %69 : vector<1x8x1xf32> to vector<1x8x8xf32>
    %71 = arith.mulf %66, %70 : vector<1x8x8xf32>
    "tpu.trace_start"() <{level = 10 : i32, message = "bqk,bkd->bqd"}> : () -> ()
    %cst_26 = arith.constant dense<0.000000e+00> : vector<1x8x16xf32>
    %72 = tpu.matmul %71, %60, %cst_26 {dimension_numbers = #tpu.dot_dimension_numbers<[2], [1], [1], [2], [0, 0, 0, 1, 1, 2], [0], [0]>} : vector<1x8x8xf32>, vector<1x8x16xf32>, vector<1x8x16xf32> -> vector<1x8x16xf32>
    "tpu.trace_stop"() : () -> ()
    %73 = vector.shape_cast %72 : vector<1x8x16xf32> to vector<8x16xf32>
    %74 = tpu.concatenate %57, %73 in 1 : vector<8x16xf32>, vector<8x16xf32> -> vector<8x32xf32>
    %c0_27 = arith.constant 0 : index
    %c0_28 = arith.constant 0 : index
    %c0_29 = arith.constant 0 : index
    %75 = vector.load %arg8[%c0_27, %c0_28, %c0_29] : memref<1x32x32xbf16, #tpu.memory_space<vmem>>, vector<1x32x32xbf16>
    %76 = vector.shape_cast %75 : vector<1x32x32xbf16> to vector<32x32xbf16>
    %c0_30 = arith.constant 0 : index
    %c0_31 = arith.constant 0 : index
    %c0_32 = arith.constant 0 : index
    %77 = vector.load %arg9[%c0_30, %c0_31, %c0_32] : memref<1x1x32xf32, #tpu.memory_space<vmem>>, vector<1x1x32xf32>
    %78 = vector.shape_cast %77 : vector<1x1x32xf32> to vector<1x32xf32>
    %79 = arith.truncf %74 : vector<8x32xf32> to vector<8x32xbf16>
    %cst_33 = arith.constant dense<0.000000e+00> : vector<8x32xf32>
    %80 = tpu.matmul %79, %76, %cst_33 {dimension_numbers = #tpu.dot_dimension_numbers<[1], [0], [0], [1], [0, 0, 1, 1], [], []>} : vector<8x32xbf16>, vector<32x32xbf16>, vector<8x32xf32> -> vector<8x32xf32>
    %81 = vector.broadcast %78 : vector<1x32xf32> to vector<8x32xf32>
    %82 = arith.addf %80, %81 : vector<8x32xf32>
    %83 = arith.addf %3, %82 : vector<8x32xf32>
    %c0_34 = arith.constant 0 : index
    %c0_35 = arith.constant 0 : index
    %c0_36 = arith.constant 0 : index
    %84 = vector.load %arg10[%c0_34, %c0_35, %c0_36] : memref<1x1x32xf32, #tpu.memory_space<vmem>>, vector<1x1x32xf32>
    %85 = vector.shape_cast %84 : vector<1x1x32xf32> to vector<1x32xf32>
    %c0_37 = arith.constant 0 : index
    %c0_38 = arith.constant 0 : index
    %c0_39 = arith.constant 0 : index
    %86 = vector.load %arg11[%c0_37, %c0_38, %c0_39] : memref<1x1x32xf32, #tpu.memory_space<vmem>>, vector<1x1x32xf32>
    %87 = vector.shape_cast %86 : vector<1x1x32xf32> to vector<1x32xf32>
    %cst_40 = arith.constant dense<0.000000e+00> : vector<8xf32>
    %88 = vector.multi_reduction <add>, %83, %cst_40 [1] : vector<8x32xf32> to vector<8xf32>
    %89 = vector.shape_cast %88 : vector<8xf32> to vector<8x1xf32>
    %cst_41 = arith.constant 3.200000e+01 : f32
    %90 = vector.broadcast %cst_41 : f32 to vector<8x1xf32>
    %91 = arith.divf %89, %90 : vector<8x1xf32>
    %92 = vector.broadcast %91 : vector<8x1xf32> to vector<8x32xf32>
    %93 = arith.subf %83, %92 : vector<8x32xf32>
    %94 = arith.mulf %93, %93 : vector<8x32xf32>
    %cst_42 = arith.constant dense<0.000000e+00> : vector<8xf32>
    %95 = vector.multi_reduction <add>, %94, %cst_42 [1] : vector<8x32xf32> to vector<8xf32>
    %96 = vector.shape_cast %95 : vector<8xf32> to vector<8x1xf32>
    %cst_43 = arith.constant 3.200000e+01 : f32
    %97 = vector.broadcast %cst_43 : f32 to vector<8x1xf32>
    %98 = arith.divf %96, %97 : vector<8x1xf32>
    %cst_44 = arith.constant 9.99999996E-13 : f32
    %99 = vector.broadcast %cst_44 : f32 to vector<8x1xf32>
    %100 = arith.addf %98, %99 : vector<8x1xf32>
    %101 = math.rsqrt %100 : vector<8x1xf32>
    %102 = vector.broadcast %101 : vector<8x1xf32> to vector<8x32xf32>
    %103 = arith.mulf %93, %102 : vector<8x32xf32>
    %104 = vector.broadcast %85 : vector<1x32xf32> to vector<8x32xf32>
    %105 = arith.mulf %103, %104 : vector<8x32xf32>
    %106 = vector.broadcast %87 : vector<1x32xf32> to vector<8x32xf32>
    %107 = arith.addf %105, %106 : vector<8x32xf32>
    %c0_45 = arith.constant 0 : index
    %c0_46 = arith.constant 0 : index
    %c0_47 = arith.constant 0 : index
    %108 = vector.load %arg12[%c0_45, %c0_46, %c0_47] : memref<1x32x128xbf16, #tpu.memory_space<vmem>>, vector<1x32x128xbf16>
    %109 = vector.shape_cast %108 : vector<1x32x128xbf16> to vector<32x128xbf16>
    %c0_48 = arith.constant 0 : index
    %c0_49 = arith.constant 0 : index
    %c0_50 = arith.constant 0 : index
    %110 = vector.load %arg13[%c0_48, %c0_49, %c0_50] : memref<1x1x128xf32, #tpu.memory_space<vmem>>, vector<1x1x128xf32>
    %111 = vector.shape_cast %110 : vector<1x1x128xf32> to vector<1x128xf32>
    %112 = arith.truncf %107 : vector<8x32xf32> to vector<8x32xbf16>
    %cst_51 = arith.constant dense<0.000000e+00> : vector<8x128xf32>
    %113 = tpu.matmul %112, %109, %cst_51 {dimension_numbers = #tpu.dot_dimension_numbers<[1], [0], [0], [1], [0, 0, 1, 1], [], []>} : vector<8x32xbf16>, vector<32x128xbf16>, vector<8x128xf32> -> vector<8x128xf32>
    %114 = vector.broadcast %111 : vector<1x128xf32> to vector<8x128xf32>
    %115 = arith.addf %113, %114 : vector<8x128xf32>
    %cst_52 = arith.constant 1.702000e+00 : f32
    %116 = vector.broadcast %cst_52 : f32 to vector<8x128xf32>
    %117 = arith.mulf %116, %115 : vector<8x128xf32>
    %118 = arith.negf %117 : vector<8x128xf32>
    %119 = math.exp %118 : vector<8x128xf32>
    %cst_53 = arith.constant 1.000000e+00 : f32
    %120 = vector.broadcast %cst_53 : f32 to vector<8x128xf32>
    %121 = arith.addf %120, %119 : vector<8x128xf32>
    %122 = arith.divf %120, %121 : vector<8x128xf32>
    %123 = arith.mulf %115, %122 : vector<8x128xf32>
    %c0_54 = arith.constant 0 : index
    %c0_55 = arith.constant 0 : index
    %c0_56 = arith.constant 0 : index
    %124 = vector.load %arg14[%c0_54, %c0_55, %c0_56] : memref<1x128x32xbf16, #tpu.memory_space<vmem>>, vector<1x128x32xbf16>
    %125 = vector.shape_cast %124 : vector<1x128x32xbf16> to vector<128x32xbf16>
    %c0_57 = arith.constant 0 : index
    %c0_58 = arith.constant 0 : index
    %c0_59 = arith.constant 0 : index
    %126 = vector.load %arg15[%c0_57, %c0_58, %c0_59] : memref<1x1x32xf32, #tpu.memory_space<vmem>>, vector<1x1x32xf32>
    %127 = vector.shape_cast %126 : vector<1x1x32xf32> to vector<1x32xf32>
    %128 = arith.truncf %123 : vector<8x128xf32> to vector<8x128xbf16>
    %cst_60 = arith.constant dense<0.000000e+00> : vector<8x32xf32>
    %129 = tpu.matmul %128, %125, %cst_60 {dimension_numbers = #tpu.dot_dimension_numbers<[1], [0], [0], [1], [0, 0, 1, 1], [], []>} : vector<8x128xbf16>, vector<128x32xbf16>, vector<8x32xf32> -> vector<8x32xf32>
    %130 = vector.broadcast %127 : vector<1x32xf32> to vector<8x32xf32>
    %131 = arith.addf %129, %130 : vector<8x32xf32>
    %132 = arith.addf %83, %131 : vector<8x32xf32>
    %c0_61 = arith.constant 0 : index
    %c0_62 = arith.constant 0 : index
    %133 = vector.load %arg17[%c0_61, %c0_62] : memref<8x32xf32, #tpu.memory_space<vmem>>, vector<8x32xf32>
    tpu.vector_store %arg17[%c0_61, %c0_62], %132 {strides = array<i32>} : memref<8x32xf32, #tpu.memory_space<vmem>>, vector<8x32xf32>,
    %c5_i32 = arith.constant 5 : i32
    %134 = arith.cmpi eq, %arg1, %c5_i32 : i32
    %135 = arith.extui %134 : i1 to i32
    %c0_i32_63 = arith.constant 0 : i32
    %136 = arith.cmpi ne, %135, %c0_i32_63 : i32
    scf.if %136 {
      %137 = vector.shape_cast %132 : vector<8x32xf32> to vector<1x8x32xf32>
      %c0_64 = arith.constant 0 : index
      %c0_65 = arith.constant 0 : index
      %c0_66 = arith.constant 0 : index
      %138 = vector.load %arg2[%c0_64, %c0_65, %c0_66] : memref<1x8x32xf32, #tpu.memory_space<vmem>>, vector<1x8x32xf32>
      %139 = arith.addf %137, %138 : vector<1x8x32xf32>
      %cst_67 = arith.constant dense<0.000000e+00> : vector<1x32xf32>
      %140 = vector.multi_reduction <add>, %139, %cst_67 [1] : vector<1x8x32xf32> to vector<1x32xf32>
      %cst_68 = arith.constant 8.000000e+00 : f32
      %141 = vector.broadcast %cst_68 : f32 to vector<1x32xf32>
      %142 = arith.divf %140, %141 : vector<1x32xf32>
      %c0_69 = arith.constant 0 : index
      %c0_70 = arith.constant 0 : index
      %c0_71 = arith.constant 0 : index
      %143 = vector.load %arg16[%c0_69, %c0_70, %c0_71] : memref<1x1x32xf32, #tpu.memory_space<vmem>>, vector<1x1x32xf32>
      %144 = vector.shape_cast %143 : vector<1x1x32xf32> to vector<1x32xf32>
      %145 = vector.shape_cast %142 : vector<1x32xf32> to vector<1x1x32xf32>
      tpu.vector_store %arg16[%c0_69, %c0_70, %c0_71], %145 {strides = array<i32>} : memref<1x1x32xf32, #tpu.memory_space<vmem>>, vector<1x1x32xf32>,
    } else {
    }
    return
  }
  func.func @transform_0(%arg0: i32, %arg1: i32) -> (i32, i32, i32) {
    %c0_i32 = arith.constant 0 : i32
    %c0_i32_0 = arith.constant 0 : i32
    %c0_i32_1 = arith.constant 0 : i32
    return %arg0, %c0_i32, %c0_i32_0 : i32, i32, i32
  }
  func.func @transform_1(%arg0: i32, %arg1: i32) -> (i32, i32) {
    %c0_i32 = arith.constant 0 : i32
    %c0_i32_0 = arith.constant 0 : i32
    %c0_i32_1 = arith.constant 0 : i32
    return %c0_i32, %c0_i32_0 : i32, i32
  }
  func.func @transform_2(%arg0: i32, %arg1: i32) -> (i32, i32, i32) {
    %c0_i32 = arith.constant 0 : i32
    %c0_i32_0 = arith.constant 0 : i32
    %c0_i32_1 = arith.constant 0 : i32
    return %arg1, %c0_i32, %c0_i32_0 : i32, i32, i32
  }
  func.func @transform_3(%arg0: i32, %arg1: i32) -> (i32, i32, i32) {
    %c0_i32 = arith.constant 0 : i32
    %c0_i32_0 = arith.constant 0 : i32
    %c0_i32_1 = arith.constant 0 : i32
    return %arg1, %c0_i32, %c0_i32_0 : i32, i32, i32
  }
  func.func @transform_4(%arg0: i32, %arg1: i32) -> (i32, i32, i32) {
    %c0_i32 = arith.constant 0 : i32
    %c0_i32_0 = arith.constant 0 : i32
    %c0_i32_1 = arith.constant 0 : i32
    return %arg1, %c0_i32, %c0_i32_0 : i32, i32, i32
  }
  func.func @transform_5(%arg0: i32, %arg1: i32) -> (i32, i32, i32) {
    %c0_i32 = arith.constant 0 : i32
    %c0_i32_0 = arith.constant 0 : i32
    %c0_i32_1 = arith.constant 0 : i32
    return %arg1, %c0_i32, %c0_i32_0 : i32, i32, i32
  }
  func.func @transform_6(%arg0: i32, %arg1: i32) -> (i32, i32, i32) {
    %c0_i32 = arith.constant 0 : i32
    %c0_i32_0 = arith.constant 0 : i32
    %c0_i32_1 = arith.constant 0 : i32
    return %arg1, %c0_i32, %c0_i32_0 : i32, i32, i32
  }
  func.func @transform_7(%arg0: i32, %arg1: i32) -> (i32, i32, i32) {
    %c0_i32 = arith.constant 0 : i32
    %c0_i32_0 = arith.constant 0 : i32
    %c0_i32_1 = arith.constant 0 : i32
    return %arg1, %c0_i32, %c0_i32_0 : i32, i32, i32
  }
  func.func @transform_8(%arg0: i32, %arg1: i32) -> (i32, i32, i32) {
    %c0_i32 = arith.constant 0 : i32
    %c0_i32_0 = arith.constant 0 : i32
    %c0_i32_1 = arith.constant 0 : i32
    return %arg1, %c0_i32, %c0_i32_0 : i32, i32, i32
  }
  func.func @transform_9(%arg0: i32, %arg1: i32) -> (i32, i32, i32) {
    %c0_i32 = arith.constant 0 : i32
    %c0_i32_0 = arith.constant 0 : i32
    %c0_i32_1 = arith.constant 0 : i32
    return %arg1, %c0_i32, %c0_i32_0 : i32, i32, i32
  }
  func.func @transform_10(%arg0: i32, %arg1: i32) -> (i32, i32, i32) {
    %c0_i32 = arith.constant 0 : i32
    %c0_i32_0 = arith.constant 0 : i32
    %c0_i32_1 = arith.constant 0 : i32
    return %arg1, %c0_i32, %c0_i32_0 : i32, i32, i32
  }
  func.func @transform_11(%arg0: i32, %arg1: i32) -> (i32, i32, i32) {
    %c0_i32 = arith.constant 0 : i32
    %c0_i32_0 = arith.constant 0 : i32
    %c0_i32_1 = arith.constant 0 : i32
    return %arg1, %c0_i32, %c0_i32_0 : i32, i32, i32
  }
  func.func @transform_12(%arg0: i32, %arg1: i32) -> (i32, i32, i32) {
    %c0_i32 = arith.constant 0 : i32
    %c0_i32_0 = arith.constant 0 : i32
    %c0_i32_1 = arith.constant 0 : i32
    return %arg1, %c0_i32, %c0_i32_0 : i32, i32, i32
  }
  func.func @transform_13(%arg0: i32, %arg1: i32) -> (i32, i32, i32) {
    %c0_i32 = arith.constant 0 : i32
    %c0_i32_0 = arith.constant 0 : i32
    %c0_i32_1 = arith.constant 0 : i32
    return %arg1, %c0_i32, %c0_i32_0 : i32, i32, i32
  }
  func.func @transform_14(%arg0: i32, %arg1: i32) -> (i32, i32, i32) {
    %c0_i32 = arith.constant 0 : i32
    %c0_i32_0 = arith.constant 0 : i32
    %c0_i32_1 = arith.constant 0 : i32
    return %arg0, %c0_i32, %c0_i32_0 : i32, i32, i32
  }
}

</mosaic_0001>

<llo_original>
// kernel: tpu_custom_call.1
$region0: #{tpu_custom_call.1}
  #allocation0 [shape = 'u32[]', space=smem, size = 0x4, offset = 0x4, fixed_abs, tag = 'smem constant byte address 0x4 - core index']
  #allocation1 [shape = 'u32[72,128]{1,0:T(1,128)}', space=vmem, size = 0x9000, scoped, tag = 'internal scratch']
  #allocation2 [shape = 'f32[8,32]{1,0:T(8,128)}', space=vmem, size = 0x1000, scoped, tag = 'scratch operand']
  %s0 = inlined_call_operand.vmem [shape: f32[2,8,32], index: 0, kind: input, shape index: {}]
  %s1 = inlined_call_operand.vmem [shape: f32[8,32], index: 1, kind: input, shape index: {}]
  %s2 = inlined_call_operand.vmem [shape: f32[6,1,32], index: 2, kind: input, shape index: {}]
  %s3 = inlined_call_operand.vmem [shape: f32[6,1,32], index: 3, kind: input, shape index: {}]
  %s4 = inlined_call_operand.vmem [shape: bf16[6,32,96], index: 4, kind: input, shape index: {}]
  %s5 = inlined_call_operand.vmem [shape: f32[6,1,96], index: 5, kind: input, shape index: {}]
  %s6 = inlined_call_operand.vmem [shape: bf16[6,32,32], index: 6, kind: input, shape index: {}]
  %s7 = inlined_call_operand.vmem [shape: f32[6,1,32], index: 7, kind: input, shape index: {}]
  %s8 = inlined_call_operand.vmem [shape: f32[6,1,32], index: 8, kind: input, shape index: {}]
  %s9 = inlined_call_operand.vmem [shape: f32[6,1,32], index: 9, kind: input, shape index: {}]
  %s10 = inlined_call_operand.vmem [shape: bf16[6,32,128], index: 10, kind: input, shape index: {}]
  %s11 = inlined_call_operand.vmem [shape: f32[6,1,128], index: 11, kind: input, shape index: {}]
  %s12 = inlined_call_operand.vmem [shape: bf16[6,128,32], index: 12, kind: input, shape index: {}]
  %s13 = inlined_call_operand.vmem [shape: f32[6,1,32], index: 13, kind: input, shape index: {}]
  %s14 = inlined_call_operand.hbm [shape: f32[2,1,32], index: 14, kind: output, shape index: {}]
  %s15 = sld [smem:[#allocation0]]
  $region97: #{tpu_custom_call.1} parent=0
    _
  %s17 = ssub.s32 1, %s15
  %s18 = scalar_select 0, %s17, %s15
  $region1: #{tpu_custom_call.1} parent=0
    #allocation3 [shape = 'u8[1024]{0}', space=vmem, size = 0x400, scoped, tag = 'output window, operand 0']
    #allocation4 [shape = 's32[2]{0}', space=sflag, size = 0x8, scoped, tag = 'scoped memory for tpu_custom_call.1']
    %19 = vsyncpa [#allocation4], 0
    %s20 = scalar_lea.sflag [#allocation4], 1
    %21 = vsyncpa %s20, 0
    loop: start=0, step=1, limit=14
    $region2: #{tpu_custom_call.1} parent=1 // loop_pre_header
      _
    $region3: #{tpu_custom_call.1} parent=1 // loop_header
      %s23 = sphi 0, %s27
      %p24 = scmp.ge.s32.totalorder %s23, 14
      %s30 = sphi 0, %s42
      %s31 = sphi 0, %s38
      %s32 = sphi 0, %s30
      %s33 = sphi 0, %s31
      %s34 = sphi 0, %s32
      %s35 = sphi 0, %s33
      %s45 = sphi 0, %s47
      %s48 = sphi 0, %s45
      %s49 = sphi 0, %s48
      %s65 = sphi 0, %s49
      %s69 = sphi 0, %s69
      %s71 = sphi 0, %s69
      %s72 = sphi 0, %s71
      %s86 = sphi 0, %s72
      %s92 = sphi 0, %s94
      %s95 = sphi 0, %s92
      %s96 = sphi 0, %s95
      %s112 = sphi 0, %s96
      %s118 = sphi 0, %s120
      %s121 = sphi 0, %s118
      %s122 = sphi 0, %s121
      %s138 = sphi 0, %s122
      %s144 = sphi 0, %s146
      %s147 = sphi 0, %s144
      %s148 = sphi 0, %s147
      %s164 = sphi 0, %s148
      %s170 = sphi 0, %s172
      %s173 = sphi 0, %s170
      %s174 = sphi 0, %s173
      %s190 = sphi 0, %s174
      %s196 = sphi 0, %s198
      %s199 = sphi 0, %s196
      %s200 = sphi 0, %s199
      %s216 = sphi 0, %s200
      %s222 = sphi 0, %s224
      %s225 = sphi 0, %s222
      %s226 = sphi 0, %s225
      %s242 = sphi 0, %s226
      %s248 = sphi 0, %s250
      %s251 = sphi 0, %s248
      %s252 = sphi 0, %s251
      %s268 = sphi 0, %s252
      %s274 = sphi 0, %s276
      %s277 = sphi 0, %s274
      %s278 = sphi 0, %s277
      %s294 = sphi 0, %s278
      %s300 = sphi 0, %s302
      %s303 = sphi 0, %s300
      %s304 = sphi 0, %s303
      %s320 = sphi 0, %s304
      %s326 = sphi 0, %s328
      %s329 = sphi 0, %s326
      %s330 = sphi 0, %s329
      %s346 = sphi 0, %s330
      %s352 = sphi 0, %s354
      %s355 = sphi 0, %s352
      %s356 = sphi 0, %s355
      %s372 = sphi 0, %s356
      %s378 = sphi 0, %s380
      %s381 = sphi 0, %s378
      %s382 = sphi 0, %s381
      %s398 = sphi 0, %s382
      %s404 = sphi 0, %s406
      %s407 = sphi 0, %s404
      %s408 = sphi 0, %s407
      %s424 = sphi 0, %s408
    $region4: #{tpu_custom_call.1} parent=1 // loop_header_branch
      %26 = sbr.rel (%p24) target = $region8
    $region5: #{tpu_custom_call.1} parent=1 // loop_body
      %s28 = ssub.s32 %s23, 1
      %s29 = ssub.s32 %s23, 2
      %s36 = sadd.s32 1, %s31
      %p37 = scmp.ge.s32.totalorder %s36, 6
      %s38 = scalar_select %p37, 0, %s36
      %s39 = sadd.s32 1, %s30
      %s40 = scalar_select %p37, %s39, %s30
      %p41 = scmp.ge.s32.totalorder %s40, 2
      %s42 = scalar_select %p41, 0, %s40
      %s43 = ssub.s32 %s30, %s42
      %p44 = scmp.eq.s32.totalorder %s43, 0
      %s46 = sadd.s32 %s45, 1
      %s47 = scalar_select %p44, %s45, %s46
      %p50 = pneg %p44
      %p51 = scmp.eq.s32.totalorder %s23, 11
      %p52 = por %p50, %p51
      %p53 = scmp.ne.s32.totalorder %s45, %s48
      %p54 = scmp.eq.s32.totalorder %s23, 0
      %p55 = por %p53, %p54
      %p56 = scmp.ne.s32.totalorder %s45, %s48
      %p57 = scmp.eq.s32.totalorder %s28, 11
      %p58 = por %p56, %p57
      %p59 = scmp.ne.s32.totalorder %s48, %s49
      %p60 = scmp.eq.s32.totalorder %s28, 0
      %p61 = por %p59, %p60
      %p62 = scmp.ne.s32.totalorder %s48, %s49
      %p63 = scmp.eq.s32.totalorder %s29, 11
      %p64 = por %p62, %p63
      %p66 = scmp.ne.s32.totalorder %s49, %s65
      %p67 = scmp.eq.s32.totalorder %s29, 0
      %p68 = por %p66, %p67
      %s70 = sadd.s32 %s69, 1
      %p73 = scmp.eq.s32.totalorder %s23, 11
      %p74 = scmp.ne.s32.totalorder %s69, %s71
      %p75 = scmp.eq.s32.totalorder %s23, 0
      %p76 = por %p74, %p75
      %p77 = scmp.ne.s32.totalorder %s69, %s71
      %p78 = scmp.eq.s32.totalorder %s28, 11
      %p79 = por %p77, %p78
      %p80 = scmp.ne.s32.totalorder %s71, %s72
      %p81 = scmp.eq.s32.totalorder %s28, 0
      %p82 = por %p80, %p81
      %p83 = scmp.ne.s32.totalorder %s71, %s72
      %p84 = scmp.eq.s32.totalorder %s29, 11
      %p85 = por %p83, %p84
      %p87 = scmp.ne.s32.totalorder %s72, %s86
      %p88 = scmp.eq.s32.totalorder %s29, 0
      %p89 = por %p87, %p88
      %s90 = ssub.s32 %s31, %s38
      %p91 = scmp.eq.s32.totalorder %s90, 0
      %s93 = sadd.s32 %s92, 1
      %s94 = scalar_select %p91, %s92, %s93
      %p97 = pneg %p91
      %p98 = scmp.eq.s32.totalorder %s23, 11
      %p99 = por %p97, %p98
      %p100 = scmp.ne.s32.totalorder %s92, %s95
      %p101 = scmp.eq.s32.totalorder %s23, 0
      %p102 = por %p100, %p101
      %p103 = scmp.ne.s32.totalorder %s92, %s95
      %p104 = scmp.eq.s32.totalorder %s28, 11
      %p105 = por %p103, %p104
      %p106 = scmp.ne.s32.totalorder %s95, %s96
      %p107 = scmp.eq.s32.totalorder %s28, 0
      %p108 = por %p106, %p107
      %p109 = scmp.ne.s32.totalorder %s95, %s96
      %p110 = scmp.eq.s32.totalorder %s29, 11
      %p111 = por %p109, %p110
      %p113 = scmp.ne.s32.totalorder %s96, %s112
      %p114 = scmp.eq.s32.totalorder %s29, 0
      %p115 = por %p113, %p114
      %s116 = ssub.s32 %s31, %s38
      %p117 = scmp.eq.s32.totalorder %s116, 0
      %s119 = sadd.s32 %s118, 1
      %s120 = scalar_select %p117, %s118, %s119
      %p123 = pneg %p117
      %p124 = scmp.eq.s32.totalorder %s23, 11
      %p125 = por %p123, %p124
      %p126 = scmp.ne.s32.totalorder %s118, %s121
      %p127 = scmp.eq.s32.totalorder %s23, 0
      %p128 = por %p126, %p127
      %p129 = scmp.ne.s32.totalorder %s118, %s121
      %p130 = scmp.eq.s32.totalorder %s28, 11
      %p131 = por %p129, %p130
      %p132 = scmp.ne.s32.totalorder %s121, %s122
      %p133 = scmp.eq.s32.totalorder %s28, 0
      %p134 = por %p132, %p133
      %p135 = scmp.ne.s32.totalorder %s121, %s122
      %p136 = scmp.eq.s32.totalorder %s29, 11
      %p137 = por %p135, %p136
      %p139 = scmp.ne.s32.totalorder %s122, %s138
      %p140 = scmp.eq.s32.totalorder %s29, 0
      %p141 = por %p139, %p140
      %s142 = ssub.s32 %s31, %s38
      %p143 = scmp.eq.s32.totalorder %s142, 0
      %s145 = sadd.s32 %s144, 1
      %s146 = scalar_select %p143, %s144, %s145
      %p149 = pneg %p143
      %p150 = scmp.eq.s32.totalorder %s23, 11
      %p151 = por %p149, %p150
      %p152 = scmp.ne.s32.totalorder %s144, %s147
      %p153 = scmp.eq.s32.totalorder %s23, 0
      %p154 = por %p152, %p153
      %p155 = scmp.ne.s32.totalorder %s144, %s147
      %p156 = scmp.eq.s32.totalorder %s28, 11
      %p157 = por %p155, %p156
      %p158 = scmp.ne.s32.totalorder %s147, %s148
      %p159 = scmp.eq.s32.totalorder %s28, 0
      %p160 = por %p158, %p159
      %p161 = scmp.ne.s32.totalorder %s147, %s148
      %p162 = scmp.eq.s32.totalorder %s29, 11
      %p163 = por %p161, %p162
      %p165 = scmp.ne.s32.totalorder %s148, %s164
      %p166 = scmp.eq.s32.totalorder %s29, 0
      %p167 = por %p165, %p166
      %s168 = ssub.s32 %s31, %s38
      %p169 = scmp.eq.s32.totalorder %s168, 0
      %s171 = sadd.s32 %s170, 1
      %s172 = scalar_select %p169, %s170, %s171
      %p175 = pneg %p169
      %p176 = scmp.eq.s32.totalorder %s23, 11
      %p177 = por %p175, %p176
      %p178 = scmp.ne.s32.totalorder %s170, %s173
      %p179 = scmp.eq.s32.totalorder %s23, 0
      %p180 = por %p178, %p179
      %p181 = scmp.ne.s32.totalorder %s170, %s173
      %p182 = scmp.eq.s32.totalorder %s28, 11
      %p183 = por %p181, %p182
      %p184 = scmp.ne.s32.totalorder %s173, %s174
      %p185 = scmp.eq.s32.totalorder %s28, 0
      %p186 = por %p184, %p185
      %p187 = scmp.ne.s32.totalorder %s173, %s174
      %p188 = scmp.eq.s32.totalorder %s29, 11
      %p189 = por %p187, %p188
      %p191 = scmp.ne.s32.totalorder %s174, %s190
      %p192 = scmp.eq.s32.totalorder %s29, 0
      %p193 = por %p191, %p192
      %s194 = ssub.s32 %s31, %s38
      %p195 = scmp.eq.s32.totalorder %s194, 0
      %s197 = sadd.s32 %s196, 1
      %s198 = scalar_select %p195, %s196, %s197
      %p201 = pneg %p195
      %p202 = scmp.eq.s32.totalorder %s23, 11
      %p203 = por %p201, %p202
      %p204 = scmp.ne.s32.totalorder %s196, %s199
      %p205 = scmp.eq.s32.totalorder %s23, 0
      %p206 = por %p204, %p205
      %p207 = scmp.ne.s32.totalorder %s196, %s199
      %p208 = scmp.eq.s32.totalorder %s28, 11
      %p209 = por %p207, %p208
      %p210 = scmp.ne.s32.totalorder %s199, %s200
      %p211 = scmp.eq.s32.totalorder %s28, 0
      %p212 = por %p210, %p211
      %p213 = scmp.ne.s32.totalorder %s199, %s200
      %p214 = scmp.eq.s32.totalorder %s29, 11
      %p215 = por %p213, %p214
      %p217 = scmp.ne.s32.totalorder %s200, %s216
      %p218 = scmp.eq.s32.totalorder %s29, 0
      %p219 = por %p217, %p218
      %s220 = ssub.s32 %s31, %s38
      %p221 = scmp.eq.s32.totalorder %s220, 0
      %s223 = sadd.s32 %s222, 1
      %s224 = scalar_select %p221, %s222, %s223
      %p227 = pneg %p221
      %p228 = scmp.eq.s32.totalorder %s23, 11
      %p229 = por %p227, %p228
      %p230 = scmp.ne.s32.totalorder %s222, %s225
      %p231 = scmp.eq.s32.totalorder %s23, 0
      %p232 = por %p230, %p231
      %p233 = scmp.ne.s32.totalorder %s222, %s225
      %p234 = scmp.eq.s32.totalorder %s28, 11
      %p235 = por %p233, %p234
      %p236 = scmp.ne.s32.totalorder %s225, %s226
      %p237 = scmp.eq.s32.totalorder %s28, 0
      %p238 = por %p236, %p237
      %p239 = scmp.ne.s32.totalorder %s225, %s226
      %p240 = scmp.eq.s32.totalorder %s29, 11
      %p241 = por %p239, %p240
      %p243 = scmp.ne.s32.totalorder %s226, %s242
      %p244 = scmp.eq.s32.totalorder %s29, 0
      %p245 = por %p243, %p244
      %s246 = ssub.s32 %s31, %s38
      %p247 = scmp.eq.s32.totalorder %s246, 0
      %s249 = sadd.s32 %s248, 1
      %s250 = scalar_select %p247, %s248, %s249
      %p253 = pneg %p247
      %p254 = scmp.eq.s32.totalorder %s23, 11
      %p255 = por %p253, %p254
      %p256 = scmp.ne.s32.totalorder %s248, %s251
      %p257 = scmp.eq.s32.totalorder %s23, 0
      %p258 = por %p256, %p257
      %p259 = scmp.ne.s32.totalorder %s248, %s251
      %p260 = scmp.eq.s32.totalorder %s28, 11
      %p261 = por %p259, %p260
      %p262 = scmp.ne.s32.totalorder %s251, %s252
      %p263 = scmp.eq.s32.totalorder %s28, 0
      %p264 = por %p262, %p263
      %p265 = scmp.ne.s32.totalorder %s251, %s252
      %p266 = scmp.eq.s32.totalorder %s29, 11
      %p267 = por %p265, %p266
      %p269 = scmp.ne.s32.totalorder %s252, %s268
      %p270 = scmp.eq.s32.totalorder %s29, 0
      %p271 = por %p269, %p270
      %s272 = ssub.s32 %s31, %s38
      %p273 = scmp.eq.s32.totalorder %s272, 0
      %s275 = sadd.s32 %s274, 1
      %s276 = scalar_select %p273, %s274, %s275
      %p279 = pneg %p273
      %p280 = scmp.eq.s32.totalorder %s23, 11
      %p281 = por %p279, %p280
      %p282 = scmp.ne.s32.totalorder %s274, %s277
      %p283 = scmp.eq.s32.totalorder %s23, 0
      %p284 = por %p282, %p283
      %p285 = scmp.ne.s32.totalorder %s274, %s277
      %p286 = scmp.eq.s32.totalorder %s28, 11
      %p287 = por %p285, %p286
      %p288 = scmp.ne.s32.totalorder %s277, %s278
      %p289 = scmp.eq.s32.totalorder %s28, 0
      %p290 = por %p288, %p289
      %p291 = scmp.ne.s32.totalorder %s277, %s278
      %p292 = scmp.eq.s32.totalorder %s29, 11
      %p293 = por %p291, %p292
      %p295 = scmp.ne.s32.totalorder %s278, %s294
      %p296 = scmp.eq.s32.totalorder %s29, 0
      %p297 = por %p295, %p296
      %s298 = ssub.s32 %s31, %s38
      %p299 = scmp.eq.s32.totalorder %s298, 0
      %s301 = sadd.s32 %s300, 1
      %s302 = scalar_select %p299, %s300, %s301
      %p305 = pneg %p299
      %p306 = scmp.eq.s32.totalorder %s23, 11
      %p307 = por %p305, %p306
      %p308 = scmp.ne.s32.totalorder %s300, %s303
      %p309 = scmp.eq.s32.totalorder %s23, 0
      %p310 = por %p308, %p309
      %p311 = scmp.ne.s32.totalorder %s300, %s303
      %p312 = scmp.eq.s32.totalorder %s28, 11
      %p313 = por %p311, %p312
      %p314 = scmp.ne.s32.totalorder %s303, %s304
      %p315 = scmp.eq.s32.totalorder %s28, 0
      %p316 = por %p314, %p315
      %p317 = scmp.ne.s32.totalorder %s303, %s304
      %p318 = scmp.eq.s32.totalorder %s29, 11
      %p319 = por %p317, %p318
      %p321 = scmp.ne.s32.totalorder %s304, %s320
      %p322 = scmp.eq.s32.totalorder %s29, 0
      %p323 = por %p321, %p322
      %s324 = ssub.s32 %s31, %s38
      %p325 = scmp.eq.s32.totalorder %s324, 0
      %s327 = sadd.s32 %s326, 1
      %s328 = scalar_select %p325, %s326, %s327
      %p331 = pneg %p325
      %p332 = scmp.eq.s32.totalorder %s23, 11
      %p333 = por %p331, %p332
      %p334 = scmp.ne.s32.totalorder %s326, %s329
      %p335 = scmp.eq.s32.totalorder %s23, 0
      %p336 = por %p334, %p335
      %p337 = scmp.ne.s32.totalorder %s326, %s329
      %p338 = scmp.eq.s32.totalorder %s28, 11
      %p339 = por %p337, %p338
      %p340 = scmp.ne.s32.totalorder %s329, %s330
      %p341 = scmp.eq.s32.totalorder %s28, 0
      %p342 = por %p340, %p341
      %p343 = scmp.ne.s32.totalorder %s329, %s330
      %p344 = scmp.eq.s32.totalorder %s29, 11
      %p345 = por %p343, %p344
      %p347 = scmp.ne.s32.totalorder %s330, %s346
      %p348 = scmp.eq.s32.totalorder %s29, 0
      %p349 = por %p347, %p348
      %s350 = ssub.s32 %s31, %s38
      %p351 = scmp.eq.s32.totalorder %s350, 0
      %s353 = sadd.s32 %s352, 1
      %s354 = scalar_select %p351, %s352, %s353
      %p357 = pneg %p351
      %p358 = scmp.eq.s32.totalorder %s23, 11
      %p359 = por %p357, %p358
      %p360 = scmp.ne.s32.totalorder %s352, %s355
      %p361 = scmp.eq.s32.totalorder %s23, 0
      %p362 = por %p360, %p361
      %p363 = scmp.ne.s32.totalorder %s352, %s355
      %p364 = scmp.eq.s32.totalorder %s28, 11
      %p365 = por %p363, %p364
      %p366 = scmp.ne.s32.totalorder %s355, %s356
      %p367 = scmp.eq.s32.totalorder %s28, 0
      %p368 = por %p366, %p367
      %p369 = scmp.ne.s32.totalorder %s355, %s356
      %p370 = scmp.eq.s32.totalorder %s29, 11
      %p371 = por %p369, %p370
      %p373 = scmp.ne.s32.totalorder %s356, %s372
      %p374 = scmp.eq.s32.totalorder %s29, 0
      %p375 = por %p373, %p374
      %s376 = ssub.s32 %s31, %s38
      %p377 = scmp.eq.s32.totalorder %s376, 0
      %s379 = sadd.s32 %s378, 1
      %s380 = scalar_select %p377, %s378, %s379
      %p383 = pneg %p377
      %p384 = scmp.eq.s32.totalorder %s23, 11
      %p385 = por %p383, %p384
      %p386 = scmp.ne.s32.totalorder %s378, %s381
      %p387 = scmp.eq.s32.totalorder %s23, 0
      %p388 = por %p386, %p387
      %p389 = scmp.ne.s32.totalorder %s378, %s381
      %p390 = scmp.eq.s32.totalorder %s28, 11
      %p391 = por %p389, %p390
      %p392 = scmp.ne.s32.totalorder %s381, %s382
      %p393 = scmp.eq.s32.totalorder %s28, 0
      %p394 = por %p392, %p393
      %p395 = scmp.ne.s32.totalorder %s381, %s382
      %p396 = scmp.eq.s32.totalorder %s29, 11
      %p397 = por %p395, %p396
      %p399 = scmp.ne.s32.totalorder %s382, %s398
      %p400 = scmp.eq.s32.totalorder %s29, 0
      %p401 = por %p399, %p400
      %s402 = ssub.s32 %s30, %s42
      %p403 = scmp.eq.s32.totalorder %s402, 0
      %s405 = sadd.s32 %s404, 1
      %s406 = scalar_select %p403, %s404, %s405
      %p409 = pneg %p403
      %p410 = scmp.eq.s32.totalorder %s23, 11
      %p411 = por %p409, %p410
      %p412 = scmp.ne.s32.totalorder %s404, %s407
      %p413 = scmp.eq.s32.totalorder %s23, 0
      %p414 = por %p412, %p413
      %p415 = scmp.ne.s32.totalorder %s404, %s407
      %p416 = scmp.eq.s32.totalorder %s28, 11
      %p417 = por %p415, %p416
      %p418 = scmp.ne.s32.totalorder %s407, %s408
      %p419 = scmp.eq.s32.totalorder %s28, 0
      %p420 = por %p418, %p419
      %p421 = scmp.ne.s32.totalorder %s407, %s408
      %p422 = scmp.eq.s32.totalorder %s29, 11
      %p423 = por %p421, %p422
      %p425 = scmp.ne.s32.totalorder %s408, %s424
      %p426 = scmp.eq.s32.totalorder %s29, 0
      %p427 = por %p425, %p426
      %p428 = scmp.le.s32.totalorder 1, %s23
      %p429 = scmp.lt.s32.totalorder %s23, 13
      %p430 = pnand %p428, %p429
      %p431 = pneg %p430
      // Predicated region
      $region9: #{tpu_custom_call.1} parent=5 // pred_check
        _
      $region10: #{tpu_custom_call.1} parent=5 // pred_check_branch
        %433 = sbr.rel (%p430) target = $region12
      $region11: #{tpu_custom_call.1} parent=5 // pred_region
        %s434 = ssub.s32 %s23, 1
        // Predicated region
        $region13: #{tpu_custom_call.1} parent=11 // pred_check
          %p435 = pneg %p82
        $region14: #{tpu_custom_call.1} parent=11 // pred_check_branch
          %437 = sbr.rel (%p435) target = $region16
        $region15: #{tpu_custom_call.1} parent=11 // pred_region
          _
        $region16: #{tpu_custom_call.1} parent=11 // pred_fallthru
          _
      $region12: #{tpu_custom_call.1} parent=5 // pred_fallthru
        _
      %p438 = scmp.lt.s32.totalorder %s23, 12
      // Predicated region
      $region17: #{tpu_custom_call.1} parent=5 // pred_check
        %p439 = pneg %p438
      $region18: #{tpu_custom_call.1} parent=5 // pred_check_branch
        %441 = sbr.rel (%p439) target = $region20
      $region19: #{tpu_custom_call.1} parent=5 // pred_region
        // Predicated region
        $region21: #{tpu_custom_call.1} parent=19 // pred_check
          %p442 = pneg %p55
        $region22: #{tpu_custom_call.1} parent=19 // pred_check_branch
          %444 = sbr.rel (%p442) target = $region24
        $region23: #{tpu_custom_call.1} parent=19 // pred_region
          %p445 = scmp.lt.s32.totalorder %s30, 1
          %s446 = scalar_select %p445, %s30, 1
          %s447 = smul.addr %s446, 8
          %s448 = scalar_lea.vmem %s0, %s447
        $region24: #{tpu_custom_call.1} parent=19 // pred_fallthru
          _
        // Predicated region
        $region25: #{tpu_custom_call.1} parent=19 // pred_check
          %p449 = pneg %p102
        $region26: #{tpu_custom_call.1} parent=19 // pred_check_branch
          %451 = sbr.rel (%p449) target = $region28
        $region27: #{tpu_custom_call.1} parent=19 // pred_region
          %p452 = scmp.lt.s32.totalorder %s31, 5
          %s453 = scalar_select %p452, %s31, 5
          %s454 = scalar_lea.vmem %s2, %s453
        $region28: #{tpu_custom_call.1} parent=19 // pred_fallthru
          _
        // Predicated region
        $region29: #{tpu_custom_call.1} parent=19 // pred_check
          %p455 = pneg %p128
        $region30: #{tpu_custom_call.1} parent=19 // pred_check_branch
          %457 = sbr.rel (%p455) target = $region32
        $region31: #{tpu_custom_call.1} parent=19 // pred_region
          %p458 = scmp.lt.s32.totalorder %s31, 5
          %s459 = scalar_select %p458, %s31, 5
          %s460 = scalar_lea.vmem %s3, %s459
        $region32: #{tpu_custom_call.1} parent=19 // pred_fallthru
          _
        // Predicated region
        $region33: #{tpu_custom_call.1} parent=19 // pred_check
          %p461 = pneg %p154
        $region34: #{tpu_custom_call.1} parent=19 // pred_check_branch
          %463 = sbr.rel (%p461) target = $region36
        $region35: #{tpu_custom_call.1} parent=19 // pred_region
          %p464 = scmp.lt.s32.totalorder %s31, 5
          %s465 = scalar_select %p464, %s31, 5
          %s466 = smul.addr %s465, 4
          %s467 = smul.addr %s466, 4
          %s468 = scalar_lea.vmem %s4, %s467
        $region36: #{tpu_custom_call.1} parent=19 // pred_fallthru
          _
        // Predicated region
        $region37: #{tpu_custom_call.1} parent=19 // pred_check
          %p469 = pneg %p180
        $region38: #{tpu_custom_call.1} parent=19 // pred_check_branch
          %471 = sbr.rel (%p469) target = $region40
        $region39: #{tpu_custom_call.1} parent=19 // pred_region
          %p472 = scmp.lt.s32.totalorder %s31, 5
          %s473 = scalar_select %p472, %s31, 5
          %s474 = scalar_lea.vmem %s5, %s473
        $region40: #{tpu_custom_call.1} parent=19 // pred_fallthru
          _
        // Predicated region
        $region41: #{tpu_custom_call.1} parent=19 // pred_check
          %p475 = pneg %p206
        $region42: #{tpu_custom_call.1} parent=19 // pred_check_branch
          %477 = sbr.rel (%p475) target = $region44
        $region43: #{tpu_custom_call.1} parent=19 // pred_region
          %p478 = scmp.lt.s32.totalorder %s31, 5
          %s479 = scalar_select %p478, %s31, 5
          %s480 = smul.addr %s479, 4
          %s481 = smul.addr %s480, 4
          %s482 = scalar_lea.vmem %s6, %s481
        $region44: #{tpu_custom_call.1} parent=19 // pred_fallthru
          _
        // Predicated region
        $region45: #{tpu_custom_call.1} parent=19 // pred_check
          %p483 = pneg %p232
        $region46: #{tpu_custom_call.1} parent=19 // pred_check_branch
          %485 = sbr.rel (%p483) target = $region48
        $region47: #{tpu_custom_call.1} parent=19 // pred_region
          %p486 = scmp.lt.s32.totalorder %s31, 5
          %s487 = scalar_select %p486, %s31, 5
          %s488 = scalar_lea.vmem %s7, %s487
        $region48: #{tpu_custom_call.1} parent=19 // pred_fallthru
          _
        // Predicated region
        $region49: #{tpu_custom_call.1} parent=19 // pred_check
          %p489 = pneg %p258
        $region50: #{tpu_custom_call.1} parent=19 // pred_check_branch
          %491 = sbr.rel (%p489) target = $region52
        $region51: #{tpu_custom_call.1} parent=19 // pred_region
          %p492 = scmp.lt.s32.totalorder %s31, 5
          %s493 = scalar_select %p492, %s31, 5
          %s494 = scalar_lea.vmem %s8, %s493
        $region52: #{tpu_custom_call.1} parent=19 // pred_fallthru
          _
        // Predicated region
        $region53: #{tpu_custom_call.1} parent=19 // pred_check
          %p495 = pneg %p284
        $region54: #{tpu_custom_call.1} parent=19 // pred_check_branch
          %497 = sbr.rel (%p495) target = $region56
        $region55: #{tpu_custom_call.1} parent=19 // pred_region
          %p498 = scmp.lt.s32.totalorder %s31, 5
          %s499 = scalar_select %p498, %s31, 5
          %s500 = scalar_lea.vmem %s9, %s499
        $region56: #{tpu_custom_call.1} parent=19 // pred_fallthru
          _
        // Predicated region
        $region57: #{tpu_custom_call.1} parent=19 // pred_check
          %p501 = pneg %p310
        $region58: #{tpu_custom_call.1} parent=19 // pred_check_branch
          %503 = sbr.rel (%p501) target = $region60
        $region59: #{tpu_custom_call.1} parent=19 // pred_region
          %p504 = scmp.lt.s32.totalorder %s31, 5
          %s505 = scalar_select %p504, %s31, 5
          %s506 = smul.addr %s505, 4
          %s507 = smul.addr %s506, 4
          %s508 = scalar_lea.vmem %s10, %s507
        $region60: #{tpu_custom_call.1} parent=19 // pred_fallthru
          _
        // Predicated region
        $region61: #{tpu_custom_call.1} parent=19 // pred_check
          %p509 = pneg %p336
        $region62: #{tpu_custom_call.1} parent=19 // pred_check_branch
          %511 = sbr.rel (%p509) target = $region64
        $region63: #{tpu_custom_call.1} parent=19 // pred_region
          %p512 = scmp.lt.s32.totalorder %s31, 5
          %s513 = scalar_select %p512, %s31, 5
          %s514 = scalar_lea.vmem %s11, %s513
        $region64: #{tpu_custom_call.1} parent=19 // pred_fallthru
          _
        // Predicated region
        $region65: #{tpu_custom_call.1} parent=19 // pred_check
          %p515 = pneg %p362
        $region66: #{tpu_custom_call.1} parent=19 // pred_check_branch
          %517 = sbr.rel (%p515) target = $region68
        $region67: #{tpu_custom_call.1} parent=19 // pred_region
          %p518 = scmp.lt.s32.totalorder %s31, 5
          %s519 = scalar_select %p518, %s31, 5
          %s520 = smul.addr %s519, 16
          %s521 = smul.addr %s520, 4
          %s522 = scalar_lea.vmem %s12, %s521
        $region68: #{tpu_custom_call.1} parent=19 // pred_fallthru
          _
        // Predicated region
        $region69: #{tpu_custom_call.1} parent=19 // pred_check
          %p523 = pneg %p388
        $region70: #{tpu_custom_call.1} parent=19 // pred_check_branch
          %525 = sbr.rel (%p523) target = $region72
        $region71: #{tpu_custom_call.1} parent=19 // pred_region
          %p526 = scmp.lt.s32.totalorder %s31, 5
          %s527 = scalar_select %p526, %s31, 5
          %s528 = scalar_lea.vmem %s13, %s527
        $region72: #{tpu_custom_call.1} parent=19 // pred_fallthru
          _
      $region20: #{tpu_custom_call.1} parent=5 // pred_fallthru
        _
      %p529 = scmp.le.s32.totalorder 1, %s23
      %p530 = scmp.lt.s32.totalorder %s23, 13
      %p531 = pnand %p529, %p530
      %p532 = pneg %p531
      // Predicated region
      $region73: #{tpu_custom_call.1} parent=5 // pred_check
        _
      $region74: #{tpu_custom_call.1} parent=5 // pred_check_branch
        %534 = sbr.rel (%p531) target = $region76
      $region75: #{tpu_custom_call.1} parent=5 // pred_region
        %s535 = ssub.s32 %s23, 1
        %p536 = scmp.lt.s32.totalorder %s32, 1
        %s537 = scalar_select %p536, %s32, 1
        %s538 = smul.addr %s537, 8
        %s539 = scalar_lea.vmem %s0, %s538
        %p540 = pneg %p61
        %p541 = pneg %p58
        %p542 = pneg %p82
        %p543 = pneg %p79
        %p544 = scmp.lt.s32.totalorder %s33, 5
        %s545 = scalar_select %p544, %s33, 5
        %s546 = scalar_lea.vmem %s2, %s545
        %p547 = pneg %p108
        %p548 = pneg %p105
        %p549 = scmp.lt.s32.totalorder %s33, 5
        %s550 = scalar_select %p549, %s33, 5
        %s551 = scalar_lea.vmem %s3, %s550
        %p552 = pneg %p134
        %p553 = pneg %p131
        %p554 = scmp.lt.s32.totalorder %s33, 5
        %s555 = scalar_select %p554, %s33, 5
        %s556 = smul.addr %s555, 4
        %s557 = smul.addr %s556, 4
        %s558 = scalar_lea.vmem %s4, %s557
        %p559 = pneg %p160
        %p560 = pneg %p157
        %p561 = scmp.lt.s32.totalorder %s33, 5
        %s562 = scalar_select %p561, %s33, 5
        %s563 = scalar_lea.vmem %s5, %s562
        %p564 = pneg %p186
        %p565 = pneg %p183
        %p566 = scmp.lt.s32.totalorder %s33, 5
        %s567 = scalar_select %p566, %s33, 5
        %s568 = smul.addr %s567, 4
        %s569 = smul.addr %s568, 4
        %s570 = scalar_lea.vmem %s6, %s569
        %p571 = pneg %p212
        %p572 = pneg %p209
        %p573 = scmp.lt.s32.totalorder %s33, 5
        %s574 = scalar_select %p573, %s33, 5
        %s575 = scalar_lea.vmem %s7, %s574
        %p576 = pneg %p238
        %p577 = pneg %p235
        %p578 = scmp.lt.s32.totalorder %s33, 5
        %s579 = scalar_select %p578, %s33, 5
        %s580 = scalar_lea.vmem %s8, %s579
        %p581 = pneg %p264
        %p582 = pneg %p261
        %p583 = scmp.lt.s32.totalorder %s33, 5
        %s584 = scalar_select %p583, %s33, 5
        %s585 = scalar_lea.vmem %s9, %s584
        %p586 = pneg %p290
        %p587 = pneg %p287
        %p588 = scmp.lt.s32.totalorder %s33, 5
        %s589 = scalar_select %p588, %s33, 5
        %s590 = smul.addr %s589, 4
        %s591 = smul.addr %s590, 4
        %s592 = scalar_lea.vmem %s10, %s591
        %p593 = pneg %p316
        %p594 = pneg %p313
        %p595 = scmp.lt.s32.totalorder %s33, 5
        %s596 = scalar_select %p595, %s33, 5
        %s597 = scalar_lea.vmem %s11, %s596
        %p598 = pneg %p342
        %p599 = pneg %p339
        %p600 = scmp.lt.s32.totalorder %s33, 5
        %s601 = scalar_select %p600, %s33, 5
        %s602 = smul.addr %s601, 16
        %s603 = smul.addr %s602, 4
        %s604 = scalar_lea.vmem %s12, %s603
        %p605 = pneg %p368
        %p606 = pneg %p365
        %p607 = scmp.lt.s32.totalorder %s33, 5
        %s608 = scalar_select %p607, %s33, 5
        %s609 = scalar_lea.vmem %s13, %s608
        %p610 = pneg %p394
        %p611 = pneg %p391
        %p612 = pneg %p420
        %p613 = pneg %p417
        %s614 = sand.u32 %s407, 1
        %s615 = scalar_lea.sflag [#allocation4], %s614
        %s616 = sand.u32 %s407, 1
        %s617 = scalar_lea.vmem [#allocation3], %s616
        %p618 = scmp.lt.s32.totalorder %s32, 1
        %s619 = scalar_select %p618, %s32, 1
        %s620 = smul.addr %s619, 8
        %s621 = scalar_lea.vmem %s0, %s620
        %p622 = scmp.lt.s32.totalorder %s33, 5
        %s623 = scalar_select %p622, %s33, 5
        %s624 = scalar_lea.vmem %s2, %s623
        %p625 = scmp.lt.s32.totalorder %s33, 5
        %s626 = scalar_select %p625, %s33, 5
        %s627 = scalar_lea.vmem %s3, %s626
        %p628 = scmp.lt.s32.totalorder %s33, 5
        %s629 = scalar_select %p628, %s33, 5
        %s630 = smul.addr %s629, 4
        %s631 = smul.addr %s630, 4
        %s632 = scalar_lea.vmem %s4, %s631
        %p633 = scmp.lt.s32.totalorder %s33, 5
        %s634 = scalar_select %p633, %s33, 5
        %s635 = scalar_lea.vmem %s5, %s634
        %p636 = scmp.lt.s32.totalorder %s33, 5
        %s637 = scalar_select %p636, %s33, 5
        %s638 = smul.addr %s637, 4
        %s639 = smul.addr %s638, 4
        %s640 = scalar_lea.vmem %s6, %s639
        %p641 = scmp.lt.s32.totalorder %s33, 5
        %s642 = scalar_select %p641, %s33, 5
        %s643 = scalar_lea.vmem %s7, %s642
        %p644 = scmp.lt.s32.totalorder %s33, 5
        %s645 = scalar_select %p644, %s33, 5
        %s646 = scalar_lea.vmem %s8, %s645
        %p647 = scmp.lt.s32.totalorder %s33, 5
        %s648 = scalar_select %p647, %s33, 5
        %s649 = scalar_lea.vmem %s9, %s648
        %p650 = scmp.lt.s32.totalorder %s33, 5
        %s651 = scalar_select %p650, %s33, 5
        %s652 = smul.addr %s651, 4
        %s653 = smul.addr %s652, 4
        %s654 = scalar_lea.vmem %s10, %s653
        %p655 = scmp.lt.s32.totalorder %s33, 5
        %s656 = scalar_select %p655, %s33, 5
        %s657 = scalar_lea.vmem %s11, %s656
        %p658 = scmp.lt.s32.totalorder %s33, 5
        %s659 = scalar_select %p658, %s33, 5
        %s660 = smul.addr %s659, 16
        %s661 = smul.addr %s660, 4
        %s662 = scalar_lea.vmem %s12, %s661
        %p663 = scmp.lt.s32.totalorder %s33, 5
        %s664 = scalar_select %p663, %s33, 5
        %s665 = scalar_lea.vmem %s13, %s664
        %p667 = scmp.eq.s32.totalorder %s33, 0
        // Predicated region
        $region77: #{tpu_custom_call.1} parent=75 // pred_check
          %p668 = pneg %p667
        $region78: #{tpu_custom_call.1} parent=75 // pred_check_branch
          %670 = sbr.rel (%p668) target = $region80
        $region79: #{tpu_custom_call.1} parent=75 // pred_region
          %v671 = vld [vmem:[%s621] sm:$0xff]
          %v672 = vld [vmem:[%s1] sm:$0xff]
          %v673 = vadd.f32 %v671, %v672
          %vm674 = vcmask 261120
          %675 = vst.msk [vmem:[#allocation2] sm:$0xff] %vm674, %v673
        $region80: #{tpu_custom_call.1} parent=75 // pred_fallthru
          _
        %v676 = vld [vmem:[#allocation2] sm:$0xff]
        %v677 = vld [vmem:[%s624] sm:$0x1]
        %v678 = vld [vmem:[%s627] sm:$0x1]
        %vm679 = vcmask 261120
        %v680 = vsel %vm679, %v676, 0.0
        %681 = vadd.xlane.f32.xlu0 %v680
        %v682 = vpop.xlane.xlu0 %681
        %v683 = vrcp.pop 32.0
        %v684 = vmul.f32 32.0, %v683
        %v685 = vsub.f32 1.0, %v684
        %v686 = vmul.f32 %v683, %v685
        %v687 = vadd.f32 %v683, %v686
        %vm688 = vweird.f32 %v683
        %v689 = vsel %vm688, %v683, %v687
        %v690 = vmul.f32 %v682, %v689
        %v691 = vsub.f32 %v676, %v690
        %v692 = vmul.f32 %v691, %v691
        %v693 = vsel %vm679, %v692, 0.0
        %694 = vadd.xlane.f32.xlu0 %v693
        %v695 = vpop.xlane.xlu0 %694
        %v696 = vmul.f32 %v695, %v689
        %v697 = vadd.f32 %v696, 1e-12
        %v698 = vrsqrt.pop %v697
        %v699 = vmul.f32 %v698, %v697
        %v700 = vmul.f32 %v699, %v698
        %v701 = vmul.f32 0.5, %v700
        %v702 = vsub.f32 1.5, %v701
        %v703 = vmul.f32 %v698, %v702
        %vm704 = vweird.f32 %v697
        %vm705 = vweird.f32 %v698
        %vm706 = vmor %vm704, %vm705
        %v707 = vsel %vm706, %v698, %v703
        %v708 = vmul.f32 %v691, %v707
        %v710 = vperm.slane %v677, 0
        %v712 = vmul.f32 %v708, %v710
        %v714 = vperm.slane %v678, 0
        %v716 = vadd.f32 %v712, %v714
        %v717 = vld [vmem:[%s632] sm:$0xf]
        %v718 = vld [vmem:[%s632 + $0x4] sm:$0xf]
        %v719 = vld [vmem:[%s632 + $0x8] sm:$0xf]
        %v720 = vld [vmem:[%s632 + $0xc] sm:$0xf]
        %v721 = vld [vmem:[%s635] sm:$0x1]
        %v722 = vpack.c.bf16 %v716, %v716
        %v724 = vperm.slane %v721, 0
        %v730 = vunpack.c.l.b16 %v717
        %v731 = vunpack.c.l.b16 %v718
        %v732 = vunpack.c.l.b16 %v719
        %v733 = vunpack.c.l.b16 %v720
        %v734 = vpack.c.b16 %v731, %v730
        %v735 = vpack.c.b16 %v733, %v732
        %v739 = vsel %vm679, %v722, 0
        %741 = vmatpush.bf16.msra.mxu0 0
        %742 = vmatpush.bf16.msra.mxu0 0
        %743 = vmatpush.bf16.msra.mxu0 0
        %744 = vmatpush.bf16.msra.mxu0 0
        %745 = vmatpush.bf16.msra.mxu0 0
        %746 = vmatpush.bf16.msra.mxu0 0
        %747 = vmatpush.bf16.msra.mxu0 %v735
        %748 = vmatpush.bf16.msra.mxu0 %v734
        %749 = vmatmul.bf16.gmra.mxu0 %v739
        %v750 = vpop.f32.mrf.mxu0
        %v751 = vadd.f32 %v724, %v750
        %v752 = vpop.f32.mrf.mxu0
        %753 = vdwg.mxu0
        %755 = vrot.lane.b32.xlu0 %v751, 96
        %v756 = vpop.permute.xlu0 %755
        %vm757 = vcmask 130048
        %v758 = vsel %vm757, %v751, 0
        %v760 = vsel %vm757, %v756, 0
        %762 = vmatpush.xpose.msra.mxu0 0.0
        %763 = vmatpush.xpose.msra.mxu0 0.0
        %764 = vmatpush.xpose.msra.mxu0 0.0
        %765 = vmatpush.xpose.msra.mxu0 0.0
        %766 = vmatpush.xpose.msra.mxu0 0.0
        %767 = vmatpush.xpose.msra.mxu0 0.0
        %768 = vmatpush.xpose.msra.mxu0 0.0
        %769 = vmatpush.xpose.msra.mxu0 0.0
        %770 = vmatpush.xpose.msra.mxu0 0.0
        %771 = vmatpush.xpose.msra.mxu0 0.0
        %772 = vmatpush.xpose.msra.mxu0 0.0
        %773 = vmatpush.xpose.msra.mxu0 0.0
        %774 = vmatpush.xpose.msra.mxu0 0.0
        %775 = vmatpush.xpose.msra.mxu0 0.0
        %776 = vmatpush.xpose.msra.mxu0 0.0
        %777 = vmatpush.xpose.msra.mxu0 %v760
        %778 = vmatmul.f32.gmra.mxu0 %v758
        %v779 = vpop.f32.mrf.mxu0
        %v780 = vadd.f32 0.0, %v779
        %781 = vdwg.mxu0
        %vm782 = vcmask 64512
        %v783 = vsel %vm782, %v780, -inf
        %784 = vmax.xlane.f32.xlu0 %v783
        %v785 = vpop.xlane.xlu0 %784
        %v786 = vsub.f32 %v780, %v785
        %v787 = vmul.f32 %v786, 1.442695
        %v788 = vpow.pop %v787
        %v789 = vsel %vm782, %v788, 0.0
        %790 = vadd.xlane.f32.xlu0 %v789
        %v791 = vpop.xlane.xlu0 %790
        %v792 = vrcp.pop %v791
        %v793 = vmul.f32 %v788, %v792
        %794 = vrot.lane.b32.xlu0 %v751, 64
        %v795 = vpop.permute.xlu0 %794
        %v798 = vsel %vm782, %v793, 0
        %800 = vmatpush.msra.mxu0 0.0
        %801 = vmatpush.msra.mxu0 0.0
        %802 = vmatpush.msra.mxu0 0.0
        %803 = vmatpush.msra.mxu0 0.0
        %804 = vmatpush.msra.mxu0 0.0
        %805 = vmatpush.msra.mxu0 0.0
        %806 = vmatpush.msra.mxu0 0.0
        %807 = vmatpush.msra.mxu0 0.0
        %808 = vmatpush.msra.mxu0 0.0
        %809 = vmatpush.msra.mxu0 0.0
        %810 = vmatpush.msra.mxu0 0.0
        %811 = vmatpush.msra.mxu0 0.0
        %812 = vmatpush.msra.mxu0 0.0
        %813 = vmatpush.msra.mxu0 0.0
        %814 = vmatpush.msra.mxu0 0.0
        %815 = vmatpush.msra.mxu0 %v795
        %816 = vmatmul.f32.gmra.mxu0 %v798
        %v817 = vpop.f32.mrf.mxu0
        %v818 = vadd.f32 0.0, %v817
        %819 = vdwg.mxu0
        %820 = vrot.lane.b32.xlu0 %v751, 112
        %v821 = vpop.permute.xlu0 %820
        %822 = vrot.lane.b32.xlu0 %v751, 80
        %v823 = vpop.permute.xlu0 %822
        %v824 = vsel %vm757, %v821, 0
        %v826 = vsel %vm757, %v823, 0
        %828 = vmatpush.xpose.msra.mxu0 0.0
        %829 = vmatpush.xpose.msra.mxu0 0.0
        %830 = vmatpush.xpose.msra.mxu0 0.0
        %831 = vmatpush.xpose.msra.mxu0 0.0
        %832 = vmatpush.xpose.msra.mxu0 0.0
        %833 = vmatpush.xpose.msra.mxu0 0.0
        %834 = vmatpush.xpose.msra.mxu0 0.0
        %835 = vmatpush.xpose.msra.mxu0 0.0
        %836 = vmatpush.xpose.msra.mxu0 0.0
        %837 = vmatpush.xpose.msra.mxu0 0.0
        %838 = vmatpush.xpose.msra.mxu0 0.0
        %839 = vmatpush.xpose.msra.mxu0 0.0
        %840 = vmatpush.xpose.msra.mxu0 0.0
        %841 = vmatpush.xpose.msra.mxu0 0.0
        %842 = vmatpush.xpose.msra.mxu0 0.0
        %843 = vmatpush.xpose.msra.mxu0 %v826
        %844 = vmatmul.f32.gmra.mxu0 %v824
        %v845 = vpop.f32.mrf.mxu0
        %v846 = vadd.f32 0.0, %v845
        %847 = vdwg.mxu0
        %v848 = vsel %vm782, %v846, -inf
        %849 = vmax.xlane.f32.xlu0 %v848
        %v850 = vpop.xlane.xlu0 %849
        %v851 = vsub.f32 %v846, %v850
        %v852 = vmul.f32 %v851, 1.442695
        %v853 = vpow.pop %v852
        %v854 = vsel %vm782, %v853, 0.0
        %855 = vadd.xlane.f32.xlu0 %v854
        %v856 = vpop.xlane.xlu0 %855
        %v857 = vrcp.pop %v856
        %v858 = vmul.f32 %v853, %v857
        %859 = vrot.lane.b32.xlu0 %v751, 48
        %v860 = vpop.permute.xlu0 %859
        %v863 = vsel %vm782, %v858, 0
        %865 = vmatpush.msra.mxu0 0.0
        %866 = vmatpush.msra.mxu0 0.0
        %867 = vmatpush.msra.mxu0 0.0
        %868 = vmatpush.msra.mxu0 0.0
        %869 = vmatpush.msra.mxu0 0.0
        %870 = vmatpush.msra.mxu0 0.0
        %871 = vmatpush.msra.mxu0 0.0
        %872 = vmatpush.msra.mxu0 0.0
        %873 = vmatpush.msra.mxu0 0.0
        %874 = vmatpush.msra.mxu0 0.0
        %875 = vmatpush.msra.mxu0 0.0
        %876 = vmatpush.msra.mxu0 0.0
        %877 = vmatpush.msra.mxu0 0.0
        %878 = vmatpush.msra.mxu0 0.0
        %879 = vmatpush.msra.mxu0 0.0
        %880 = vmatpush.msra.mxu0 %v860
        %881 = vmatmul.f32.gmra.mxu0 %v863
        %v882 = vpop.f32.mrf.mxu0
        %v883 = vadd.f32 0.0, %v882
        %884 = vdwg.mxu0
        %886 = vrot.lane.b32.xlu0 %v883, 16
        %v887 = vpop.permute.xlu0 %886
        %v889 = vsel %vm757, %v818, %v887
        %v890 = vld [vmem:[%s640] sm:$0xf]
        %v891 = vld [vmem:[%s640 + $0x4] sm:$0xf]
        %v892 = vld [vmem:[%s640 + $0x8] sm:$0xf]
        %v893 = vld [vmem:[%s640 + $0xc] sm:$0xf]
        %v894 = vld [vmem:[%s643] sm:$0x1]
        %v895 = vpack.c.bf16 %v889, %v889
        %v897 = vperm.slane %v894, 0
        %v903 = vunpack.c.l.b16 %v890
        %v904 = vunpack.c.l.b16 %v891
        %v905 = vunpack.c.l.b16 %v892
        %v906 = vunpack.c.l.b16 %v893
        %v907 = vpack.c.b16 %v904, %v903
        %v908 = vpack.c.b16 %v906, %v905
        %v912 = vsel %vm679, %v895, 0
        %914 = vmatpush.bf16.msra.mxu0 0
        %915 = vmatpush.bf16.msra.mxu0 0
        %916 = vmatpush.bf16.msra.mxu0 0
        %917 = vmatpush.bf16.msra.mxu0 0
        %918 = vmatpush.bf16.msra.mxu0 0
        %919 = vmatpush.bf16.msra.mxu0 0
        %920 = vmatpush.bf16.msra.mxu0 %v908
        %921 = vmatpush.bf16.msra.mxu0 %v907
        %922 = vmatmul.bf16.gmra.mxu0 %v912
        %v923 = vpop.f32.mrf.mxu0
        %v924 = vadd.f32 %v897, %v923
        %v925 = vpop.f32.mrf.mxu0
        %926 = vdwg.mxu0
        %v927 = vadd.f32 %v676, %v924
        %v928 = vld [vmem:[%s646] sm:$0x1]
        %v929 = vld [vmem:[%s649] sm:$0x1]
        %v930 = vsel %vm679, %v927, 0.0
        %931 = vadd.xlane.f32.xlu0 %v930
        %v932 = vpop.xlane.xlu0 %931
        %v933 = vmul.f32 %v932, %v689
        %v934 = vsub.f32 %v927, %v933
        %v935 = vmul.f32 %v934, %v934
        %v936 = vsel %vm679, %v935, 0.0
        %937 = vadd.xlane.f32.xlu0 %v936
        %v938 = vpop.xlane.xlu0 %937
        %v939 = vmul.f32 %v938, %v689
        %v940 = vadd.f32 %v939, 1e-12
        %v941 = vrsqrt.pop %v940
        %v942 = vmul.f32 %v941, %v940
        %v943 = vmul.f32 %v942, %v941
        %v944 = vmul.f32 0.5, %v943
        %v945 = vsub.f32 1.5, %v944
        %v946 = vmul.f32 %v941, %v945
        %vm947 = vweird.f32 %v940
        %vm948 = vweird.f32 %v941
        %vm949 = vmor %vm947, %vm948
        %v950 = vsel %vm949, %v941, %v946
        %v951 = vmul.f32 %v934, %v950
        %v953 = vperm.slane %v928, 0
        %v955 = vmul.f32 %v951, %v953
        %v957 = vperm.slane %v929, 0
        %v959 = vadd.f32 %v955, %v957
        %v960 = vld [vmem:[%s654] sm:$0xf]
        %v961 = vld [vmem:[%s654 + $0x4] sm:$0xf]
        %v962 = vld [vmem:[%s654 + $0x8] sm:$0xf]
        %v963 = vld [vmem:[%s654 + $0xc] sm:$0xf]
        %v964 = vld [vmem:[%s657] sm:$0x1]
        %v965 = vpack.c.bf16 %v959, %v959
        %v967 = vperm.slane %v964, 0
        %v973 = vunpack.c.l.b16 %v960
        %v974 = vunpack.c.l.b16 %v961
        %v975 = vunpack.c.l.b16 %v962
        %v976 = vunpack.c.l.b16 %v963
        %v977 = vpack.c.b16 %v974, %v973
        %v978 = vpack.c.b16 %v976, %v975
        %v982 = vsel %vm679, %v965, 0
        %984 = vmatpush.bf16.msra.mxu0 0
        %985 = vmatpush.bf16.msra.mxu0 0
        %986 = vmatpush.bf16.msra.mxu0 0
        %987 = vmatpush.bf16.msra.mxu0 0
        %988 = vmatpush.bf16.msra.mxu0 0
        %989 = vmatpush.bf16.msra.mxu0 0
        %990 = vmatpush.bf16.msra.mxu0 %v978
        %991 = vmatpush.bf16.msra.mxu0 %v977
        %992 = vmatmul.bf16.gmra.mxu0 %v982
        %v993 = vpop.f32.mrf.mxu0
        %v994 = vadd.f32 %v967, %v993
        %v995 = vpop.f32.mrf.mxu0
        %996 = vdwg.mxu0
        %v997 = vmul.f32 %v994, 1.702
        %v998 = vxor.u32 %v997, 2147483648
        %v999 = vmul.f32 %v998, 1.442695
        %v1000 = vpow.pop %v999
        %v1001 = vadd.f32 %v1000, 1.0
        %v1002 = vrcp.pop %v1001
        %v1003 = vmul.f32 %v1001, %v1002
        %v1004 = vsub.f32 1.0, %v1003
        %v1005 = vmul.f32 %v1002, %v1004
        %v1006 = vadd.f32 %v1002, %v1005
        %vm1007 = vweird.f32 %v1001
        %vm1008 = vweird.f32 %v1002
        %vm1009 = vmor %vm1007, %vm1008
        %v1010 = vsel %vm1009, %v1002, %v1006
        %v1011 = vand.u32 2147483647, %v1001
        %vm1012 = vcmp.eq.f32.partialorder %v1011, 8.507059e+37
        %v1013 = vand.u32 %v1001, 2147483648
        %v1014 = vor.u32 1.1754944e-38, %v1013
        %v1015 = vsel %vm1012, %v1014, %v1010
        %v1016 = vmul.f32 1.0, %v1015
        %v1017 = vmul.f32 %v994, %v1016
        %v1018 = vld [vmem:[%s662] sm:$0xf]
        %v1019 = vld [vmem:[%s662 + $0x4] sm:$0xf]
        %v1020 = vld [vmem:[%s662 + $0x8] sm:$0xf]
        %v1021 = vld [vmem:[%s662 + $0xc] sm:$0xf]
        %v1022 = vld [vmem:[%s662 + $0x10] sm:$0xf]
        %v1023 = vld [vmem:[%s662 + $0x14] sm:$0xf]
        %v1024 = vld [vmem:[%s662 + $0x18] sm:$0xf]
        %v1025 = vld [vmem:[%s662 + $0x1c] sm:$0xf]
        %v1026 = vld [vmem:[%s662 + $0x20] sm:$0xf]
        %v1027 = vld [vmem:[%s662 + $0x24] sm:$0xf]
        %v1028 = vld [vmem:[%s662 + $0x28] sm:$0xf]
        %v1029 = vld [vmem:[%s662 + $0x2c] sm:$0xf]
        %v1030 = vld [vmem:[%s662 + $0x30] sm:$0xf]
        %v1031 = vld [vmem:[%s662 + $0x34] sm:$0xf]
        %v1032 = vld [vmem:[%s662 + $0x38] sm:$0xf]
        %v1033 = vld [vmem:[%s662 + $0x3c] sm:$0xf]
        %v1034 = vld [vmem:[%s665] sm:$0x1]
        %v1035 = vpack.c.bf16 %v1017, %v1017
        %v1037 = vperm.slane %v1034, 0
        %v1055 = vunpack.c.l.b16 %v1018
        %v1056 = vunpack.c.l.b16 %v1019
        %v1057 = vunpack.c.l.b16 %v1020
        %v1058 = vunpack.c.l.b16 %v1021
        %v1059 = vunpack.c.l.b16 %v1022
        %v1060 = vunpack.c.l.b16 %v1023
        %v1061 = vunpack.c.l.b16 %v1024
        %v1062 = vunpack.c.l.b16 %v1025
        %v1063 = vunpack.c.l.b16 %v1026
        %v1064 = vunpack.c.l.b16 %v1027
        %v1065 = vunpack.c.l.b16 %v1028
        %v1066 = vunpack.c.l.b16 %v1029
        %v1067 = vunpack.c.l.b16 %v1030
        %v1068 = vunpack.c.l.b16 %v1031
        %v1069 = vunpack.c.l.b16 %v1032
        %v1070 = vunpack.c.l.b16 %v1033
        %v1071 = vpack.c.b16 %v1056, %v1055
        %v1072 = vpack.c.b16 %v1058, %v1057
        %v1073 = vpack.c.b16 %v1060, %v1059
        %v1074 = vpack.c.b16 %v1062, %v1061
        %v1075 = vpack.c.b16 %v1064, %v1063
        %v1076 = vpack.c.b16 %v1066, %v1065
        %v1077 = vpack.c.b16 %v1068, %v1067
        %v1078 = vpack.c.b16 %v1070, %v1069
        %1087 = vmatpush.bf16.msra.mxu0 %v1078
        %1088 = vmatpush.bf16.msra.mxu0 %v1077
        %1089 = vmatpush.bf16.msra.mxu0 %v1076
        %1090 = vmatpush.bf16.msra.mxu0 %v1075
        %1091 = vmatpush.bf16.msra.mxu0 %v1074
        %1092 = vmatpush.bf16.msra.mxu0 %v1073
        %1093 = vmatpush.bf16.msra.mxu0 %v1072
        %1094 = vmatpush.bf16.msra.mxu0 %v1071
        %1095 = vmatmul.bf16.gmra.mxu0 %v1035
        %v1096 = vpop.f32.mrf.mxu0
        %v1097 = vadd.f32 %v1037, %v1096
        %v1098 = vpop.f32.mrf.mxu0
        %1099 = vdwg.mxu0
        %v1100 = vadd.f32 %v927, %v1097
        %1101 = vst.msk [vmem:[#allocation2] sm:$0xff] %vm679, %v1100
        %p1102 = scmp.eq.s32.totalorder %s33, 5
        // Predicated region
        $region81: #{tpu_custom_call.1} parent=75 // pred_check
          %p1103 = pneg %p1102
        $region82: #{tpu_custom_call.1} parent=75 // pred_check_branch
          %1105 = sbr.rel (%p1103) target = $region84
        $region83: #{tpu_custom_call.1} parent=75 // pred_region
          %v1106 = vld [vmem:[%s621] sm:$0xff]
          %v1107 = vadd.f32 %v1100, %v1106
          %v1108 = vsel %vm679, %v1107, 0.0
          %v1109 = vrot.slane %v1108, 4
          %v1110 = vadd.f32 %v1108, %v1109
          %v1111 = vrot.slane %v1110, 2
          %v1112 = vadd.f32 %v1110, %v1111
          %v1113 = vrot.slane %v1112, 1
          %v1114 = vadd.f32 %v1112, %v1113
          %v1115 = vrcp.pop 8.0
          %v1116 = vmul.f32 8.0, %v1115
          %v1117 = vsub.f32 1.0, %v1116
          %v1118 = vmul.f32 %v1115, %v1117
          %v1119 = vadd.f32 %v1115, %v1118
          %vm1120 = vweird.f32 %v1115
          %v1121 = vsel %vm1120, %v1115, %v1119
          %v1122 = vmul.f32 %v1114, %v1121
          %vm1123 = vcmask 253952
          %1124 = vst.msk [vmem:[%s617] sm:$0x1] %vm1123, %v1122
        $region84: #{tpu_custom_call.1} parent=75 // pred_fallthru
          _
        %s1125 = sand.u32 %s407, 1
        %s1126 = scalar_lea.sflag [#allocation4], %s1125
        %s1127 = sand.u32 %s407, 1
        %s1128 = scalar_lea.vmem [#allocation3], %s1127
        // Predicated region
        $region85: #{tpu_custom_call.1} parent=75 // pred_check
          %p1129 = pneg %p417
        $region86: #{tpu_custom_call.1} parent=75 // pred_check_branch
          %1131 = sbr.rel (%p1129) target = $region88
        $region87: #{tpu_custom_call.1} parent=75 // pred_region
          %1133 = vsyncadd %s1126, 0
          %s1134 = scalar_lea.hbm %s14, %s32
          %s1136 = sshll.u32 %s1128, 4
          %s1137 = int_to_ptr.vmem [resolvable:$true] %s1136
          %s1138 = sshll.u32 %s1134, 4
          %s1139 = int_to_ptr.hbm [resolvable:$true] %s1138
          %1141 = dma.vmem_to_hbm [thread:$0]  %s1137, 16, %s1139, %s1126
        $region88: #{tpu_custom_call.1} parent=75 // pred_fallthru
          _
      $region76: #{tpu_custom_call.1} parent=5 // pred_fallthru
        _
      %p1142 = scmp.le.s32.totalorder 2, %s23
      // Predicated region
      $region89: #{tpu_custom_call.1} parent=5 // pred_check
        %p1143 = pneg %p1142
      $region90: #{tpu_custom_call.1} parent=5 // pred_check_branch
        %1145 = sbr.rel (%p1143) target = $region92
      $region91: #{tpu_custom_call.1} parent=5 // pred_region
        %s1146 = ssub.s32 %s23, 2
        // Predicated region
        $region93: #{tpu_custom_call.1} parent=91 // pred_check
          %p1147 = pneg %p423
        $region94: #{tpu_custom_call.1} parent=91 // pred_check_branch
          %1149 = sbr.rel (%p1147) target = $region96
        $region95: #{tpu_custom_call.1} parent=91 // pred_region
          %s1150 = sand.u32 %s408, 1
          %s1151 = scalar_lea.sflag [#allocation4], %s1150
          %s1152 = sand.u32 %s408, 1
          %s1153 = scalar_lea.vmem [#allocation3], %s1152
          %1155 = dma.done %s1151, 16
        $region96: #{tpu_custom_call.1} parent=91 // pred_fallthru
          _
      $region92: #{tpu_custom_call.1} parent=5 // pred_fallthru
        _
    $region6: #{tpu_custom_call.1} parent=1 // loop_footer
      %s27 = sadd.s32 1, %s23
    $region7: #{tpu_custom_call.1} parent=1 // loop_footer_branch
      %22 = sbr.rel target = $region3
    $region8: #{tpu_custom_call.1} parent=1 // loop_exit
      _
    %1156 = vsyncpa [#allocation4], 1
    %s1157 = scalar_lea.sflag [#allocation4], 1
    %1158 = vsyncpa %s1157, 1

</llo_original>
